<compile_context>
chip_gen: v7x
topology: tpu7x:2x2x1
jax: 0.10.0
libtpu: 0.0.40
codegen_flags: <defaults>
</compile_context>

<pallas_src>
import jax
import jax.numpy as jnp
from jax.experimental import pallas as pl
from jax.experimental.pallas import tpu as pltpu

# Shapes implied by the PyTorch module.
C_IN = 100            # embedding_size == Conv1d in_channels
C_OUT = 100           # Conv1d out_channels
K = 8                 # Conv1d kernel size
L_OUT = 42            # Linear(4200, 1) => 100 * 42 conv output positions
SEQ = L_OUT + K - 1   # 49 input positions

# TPU-friendly padded shapes.
C_PAD = 128           # lane-aligned output-channel width
L_PAD = 48            # conv output rows per sample, multiple of 8 (sublane aligned)
SEQ_PAD = L_PAD + K   # 56, multiple of 8
MAX_B_TILE = 64       # per-step footprint ~5 MiB; fits default scoped VMEM on v5e/v6e/v7x


def cnn_kernel(xoh_ref, wfold_ref, cb_ref, lw_ref, lb_ref, out_ref):
    # xoh_ref:  (B_TILE, 56, V_PAD) bf16 one-hot token ids (exact 0/1 values)
    # wfold_ref:(K, V_PAD, 128)     bf16 folded (embedding @ conv) weight, zero on pads
    # cb_ref:   (1, 128)            f32 conv bias (zero on pad channels)
    # lw_ref:   (48, 128)           f32 linear weight, lw[t, c] = Lw[0, c*42 + t], zero on pads
    # lb_ref:   (1, 1)              f32 linear bias (SMEM scalar)
    # out_ref:  (B_TILE, 128)       f32 logits, broadcast across the lane axis (lane-dense store)
    bt = xoh_ref.shape[0]
    v_pad = xoh_ref.shape[2]

    x_oh = xoh_ref[...]                                      # (B_TILE, 56, V_PAD) bf16
    wf = wfold_ref[...]                                      # (K, V_PAD, 128)     bf16

    # Conv1d(valid) with folded embedding: K accumulating shallow MXU matmuls over the
    # sublane-shifted one-hot windows.  No im2col temp is ever materialized.
    conv = jnp.zeros((bt * L_PAD, C_PAD), jnp.float32)
    for k in range(K):                                       # static unroll, K == 8
        win = x_oh[:, k:k + L_PAD, :].reshape(bt * L_PAD, v_pad)   # (B_TILE*48, V_PAD) bf16
        conv = conv + jnp.dot(win, wf[k], preferred_element_type=jnp.float32)
    conv = conv + cb_ref[...]                                # conv bias, broadcast over rows
    relu = jnp.maximum(conv, 0.0)                            # ReLU, f32

    # TODO(synk): nn.Dropout(0.2) treated as inference-mode identity (no RNG masking).

    # Flatten + Linear(4200, 1): linear weight carries zeros on pad rows/channels, so no
    # masking needed.  Lane-reduce first, then per-sample (sublane) reduce.
    relu3 = relu.reshape(bt, L_PAD, C_PAD)                   # clean split (48 % 8 == 0)
    weighted = relu3 * lw_ref[...][None, :, :]               # (B_TILE, 48, 128) f32
    lane_sum = jnp.sum(weighted, axis=2)                     # (B_TILE, 48)
    logits = jnp.sum(lane_sum, axis=1, keepdims=True) + lb_ref[0, 0]   # (B_TILE, 1)

    # Lane-dense output: broadcast each sample's logit across all 128 lanes (unmasked vst).
    out_ref[...] = jnp.broadcast_to(logits, (bt, C_PAD))


def prepare_params(emb_matrix, conv_w, conv_b, lin_w, lin_b):
    """One-time (model-load) re-layout: fold embedding into the conv weight, pad, cast."""
    vocab = emb_matrix.shape[0]
    v_pad = max(16, ((vocab + 15) // 16) * 16)
    # NOTE: the fold is exact for any vocab size; it only stops being a *perf* win once the
    # vocabulary approaches the embedding width (~100+).  Nucleotide models have vocab ~ 5.

    # Wfold[k, v, c_out] = sum_cin E[v, cin] * W_torch[c_out, cin, k]   (f32 fold, bf16 cast last)
    wf = jnp.einsum("vc,ock->kvo",
                    emb_matrix.astype(jnp.float32),
                    conv_w.astype(jnp.float32))              # (K, vocab, C_OUT)
    wfold = jnp.zeros((K, v_pad, C_PAD), jnp.float32)
    wfold = wfold.at[:, :vocab, :C_OUT].set(wf).astype(jnp.bfloat16)

    cb = jnp.zeros((1, C_PAD), jnp.float32).at[0, :C_OUT].set(conv_b.astype(jnp.float32))

    # Linear weight: PyTorch flattens the NCW conv output channel-major: flat = c*42 + t.
    lw = jnp.zeros((L_PAD, C_PAD), jnp.float32)
    lw = lw.at[:L_OUT, :C_OUT].set(lin_w.reshape(C_OUT, L_OUT).T.astype(jnp.float32))

    lb = lin_b.reshape(1, 1).astype(jnp.float32)
    return wfold, cb, lw, lb


def _choose_batch_tiling(B):
    # >= 2 grid steps whenever B > 8 so both v7x TensorCores get work; tiles multiple of 8.
    if B <= 8:
        return B, B
    half = pl.cdiv(B, 2)
    b_tile = min(MAX_B_TILE, pl.cdiv(half, 8) * 8)
    b_pad = pl.cdiv(B, b_tile) * b_tile
    return b_tile, b_pad


@jax.jit
def cnn_forward(x_idx, wfold, cb, lw, lb):
    B, seq = x_idx.shape
    v_pad = wfold.shape[1]

    # Tiny host-side prep: pad the sequence and one-hot the int ids (exact in bf16).
    # This is the only data the kernel DMAs per sample (~1.75 KiB vs ~14 KiB of embeddings).
    x_p = jnp.pad(x_idx, ((0, 0), (0, SEQ_PAD - seq)))               # (B, 56) int32
    x_oh = jax.nn.one_hot(x_p, v_pad, dtype=jnp.bfloat16)            # (B, 56, V_PAD)

    b_tile, b_pad = _choose_batch_tiling(B)
    if b_pad != B:
        x_oh = jnp.pad(x_oh, ((0, b_pad - B), (0, 0), (0, 0)))
    grid = (b_pad // b_tile,)

    out = pl.pallas_call(
        cnn_kernel,
        out_shape=jax.ShapeDtypeStruct((b_pad, C_PAD), jnp.float32),
        grid_spec=pltpu.PrefetchScalarGridSpec(
            num_scalar_prefetch=0,
            grid=grid,
            in_specs=[
                pl.BlockSpec((b_tile, SEQ_PAD, v_pad), lambda i: (i, 0, 0)),  # one-hot ids
                pl.BlockSpec((K, v_pad, C_PAD), lambda i: (0, 0, 0)),         # folded conv weight
                pl.BlockSpec((1, C_PAD), lambda i: (0, 0)),                   # conv bias
                pl.BlockSpec((L_PAD, C_PAD), lambda i: (0, 0)),               # linear weight
                pl.BlockSpec(memory_space=pltpu.MemorySpace.SMEM),            # linear bias scalar
            ],
            out_specs=pl.BlockSpec((b_tile, C_PAD), lambda i: (i, 0)),
        ),
        compiler_params=pltpu.CompilerParams(
            dimension_semantics=("parallel",)),
    )(x_oh, wfold, cb, lw, lb)

    logits = out[:B, 0]                                      # drop batch padding, lane 0
    # F.softmax(preds.squeeze()): softmax over the batch axis — hoisted out of the kernel
    # so batch tiles stay independent.
    return jax.nn.softmax(logits)


def cnn_forward_ref(x_idx, emb_matrix, conv_w, conv_b, lin_w, lin_b):
    # Pure-JAX f32 reference mirroring the PyTorch forward (NCW conv).
    emb = emb_matrix[x_idx]                                  # (B, 49, 100)
    ncw = jnp.transpose(emb, (0, 2, 1))                      # (B, 100, 49)
    conv = jax.lax.conv_general_dilated(
        ncw, conv_w, window_strides=(1,), padding="VALID",
        dimension_numbers=("NCH", "OIH", "NCH")) + conv_b[None, :, None]
    relu = jnp.maximum(conv, 0.0)
    flat = relu.reshape(relu.shape[0], -1)                   # (B, 4200), channel-major
    preds = flat @ lin_w.T + lin_b                           # (B, 1)
    return jax.nn.softmax(preds.squeeze())                   # softmax over batch


if __name__ == "__main__":
    key = jax.random.PRNGKey(0)
    k1, k2, k3, k4, k5, k6, k7 = jax.random.split(key, 7)

    nuc_vocab_size = 4                   # A/C/G/T; module adds +1 => 5 embedding rows
    vocab = nuc_vocab_size + 1

    # Deterministic synthetic parameters (shapes from the module __init__).
    emb_matrix = jax.random.normal(k2, (vocab, C_IN), jnp.float32)         # embd_matrix
    conv_w = 0.02 * jax.random.normal(k3, (C_OUT, C_IN, K), jnp.float32)   # Conv1d weight
    conv_b = 0.01 * jax.random.normal(k4, (C_OUT,), jnp.float32)           # Conv1d bias
    lin_w = 0.01 * jax.random.normal(k5, (1, C_OUT * L_OUT), jnp.float32)  # Linear weight
    lin_b = 0.01 * jax.random.normal(k6, (1,), jnp.float32)                # Linear bias

    # One-time parameter fold / re-layout (outside the jitted forward).
    params = prepare_params(emb_matrix, conv_w, conv_b, lin_w, lin_b)
    params = jax.tree_util.tree_map(jax.block_until_ready, params)

    # Exercise both the single-step path (B=2) and the multi-step "parallel" grid (B=20).
    for B, kk in ((2, k1), (20, k7)):
        x_idx = jax.random.randint(kk, (B, SEQ), 0, vocab, dtype=jnp.int32)    # (B, 49)
        out = jax.block_until_ready(cnn_forward(x_idx, *params))
        ref = cnn_forward_ref(x_idx, emb_matrix, conv_w, conv_b, lin_w, lin_b)
        assert out.shape == (B,)
        assert jnp.allclose(jnp.sum(out), 1.0, atol=1e-5)
        # bf16 folded weights on the MXU => slightly relaxed tolerance vs the f32 reference.
        assert jnp.allclose(out, ref, atol=2e-3, rtol=2e-3), (B, out, ref)

    print("KERNEL_OK")
</pallas_src>

<mosaic_0001>
module attributes {stable_mosaic.version = 11 : i64} {
  func.func @cnn_kernel(%arg0: i32, %arg1: memref<2x56x16xbf16, #tpu.memory_space<vmem>>, %arg2: memref<8x16x128xbf16, #tpu.memory_space<vmem>>, %arg3: memref<1x128xf32, #tpu.memory_space<vmem>>, %arg4: memref<48x128xf32, #tpu.memory_space<vmem>>, %arg5: memref<1x1xf32, #tpu.memory_space<smem>>, %arg6: memref<2x128xf32, #tpu.memory_space<vmem>>) attributes {dimension_semantics = [#tpu.dimension_semantics<parallel>], iteration_bounds = array<i64: 1>, scalar_prefetch = 0 : i64, scratch_operands = 0 : i64, tpu.core_type = #tpu.core_type<tc>, window_params = [{transform_indices = @transform_0, window_bounds = array<i64: 2, 56, 16>}, {pipeline_mode = #tpu.pipeline_mode<synchronous>, transform_indices = @transform_1, window_bounds = array<i64: 8, 16, 128>}, {pipeline_mode = #tpu.pipeline_mode<synchronous>, transform_indices = @transform_2, window_bounds = array<i64: 1, 128>}, {pipeline_mode = #tpu.pipeline_mode<synchronous>, transform_indices = @transform_3, window_bounds = array<i64: 48, 128>}, {transform_indices = @transform_4, window_bounds = array<i64: 1, 1>}, {transform_indices = @transform_5, window_bounds = array<i64: 2, 128>}]} {
    %c0 = arith.constant 0 : index
    %c0_0 = arith.constant 0 : index
    %c0_1 = arith.constant 0 : index
    %0 = vector.load %arg1[%c0, %c0_0, %c0_1] : memref<2x56x16xbf16, #tpu.memory_space<vmem>>, vector<2x56x16xbf16>
    %c0_2 = arith.constant 0 : index
    %c0_3 = arith.constant 0 : index
    %c0_4 = arith.constant 0 : index
    %1 = vector.load %arg2[%c0_2, %c0_3, %c0_4] : memref<8x16x128xbf16, #tpu.memory_space<vmem>>, vector<8x16x128xbf16>
    %cst = arith.constant 0.000000e+00 : f32
    %2 = vector.broadcast %cst : f32 to vector<96x128xf32>
    %3 = vector.extract_strided_slice %0 {offsets = [0, 0, 0], sizes = [2, 48, 16], strides = [1, 1, 1]} : vector<2x56x16xbf16> to vector<2x48x16xbf16>
    %4 = vector.shape_cast %3 : vector<2x48x16xbf16> to vector<96x16xbf16>
    %5 = vector.extract_strided_slice %1 {offsets = [0, 0, 0], sizes = [1, 16, 128], strides = [1, 1, 1]} : vector<8x16x128xbf16> to vector<1x16x128xbf16>
    %6 = vector.shape_cast %5 : vector<1x16x128xbf16> to vector<16x128xbf16>
    %cst_5 = arith.constant dense<0.000000e+00> : vector<96x128xf32>
    %7 = tpu.matmul %4, %6, %cst_5 {dimension_numbers = #tpu.dot_dimension_numbers<[1], [0], [0], [1], [0, 0, 1, 1], [], []>} : vector<96x16xbf16>, vector<16x128xbf16>, vector<96x128xf32> -> vector<96x128xf32>
    %8 = arith.addf %2, %7 : vector<96x128xf32>
    %9 = vector.extract_strided_slice %0 {offsets = [0, 1, 0], sizes = [2, 48, 16], strides = [1, 1, 1]} : vector<2x56x16xbf16> to vector<2x48x16xbf16>
    %10 = vector.shape_cast %9 : vector<2x48x16xbf16> to vector<96x16xbf16>
    %11 = vector.extract_strided_slice %1 {offsets = [1, 0, 0], sizes = [1, 16, 128], strides = [1, 1, 1]} : vector<8x16x128xbf16> to vector<1x16x128xbf16>
    %12 = vector.shape_cast %11 : vector<1x16x128xbf16> to vector<16x128xbf16>
    %cst_6 = arith.constant dense<0.000000e+00> : vector<96x128xf32>
    %13 = tpu.matmul %10, %12, %cst_6 {dimension_numbers = #tpu.dot_dimension_numbers<[1], [0], [0], [1], [0, 0, 1, 1], [], []>} : vector<96x16xbf16>, vector<16x128xbf16>, vector<96x128xf32> -> vector<96x128xf32>
    %14 = arith.addf %8, %13 : vector<96x128xf32>
    %15 = vector.extract_strided_slice %0 {offsets = [0, 2, 0], sizes = [2, 48, 16], strides = [1, 1, 1]} : vector<2x56x16xbf16> to vector<2x48x16xbf16>
    %16 = vector.shape_cast %15 : vector<2x48x16xbf16> to vector<96x16xbf16>
    %17 = vector.extract_strided_slice %1 {offsets = [2, 0, 0], sizes = [1, 16, 128], strides = [1, 1, 1]} : vector<8x16x128xbf16> to vector<1x16x128xbf16>
    %18 = vector.shape_cast %17 : vector<1x16x128xbf16> to vector<16x128xbf16>
    %cst_7 = arith.constant dense<0.000000e+00> : vector<96x128xf32>
    %19 = tpu.matmul %16, %18, %cst_7 {dimension_numbers = #tpu.dot_dimension_numbers<[1], [0], [0], [1], [0, 0, 1, 1], [], []>} : vector<96x16xbf16>, vector<16x128xbf16>, vector<96x128xf32> -> vector<96x128xf32>
    %20 = arith.addf %14, %19 : vector<96x128xf32>
    %21 = vector.extract_strided_slice %0 {offsets = [0, 3, 0], sizes = [2, 48, 16], strides = [1, 1, 1]} : vector<2x56x16xbf16> to vector<2x48x16xbf16>
    %22 = vector.shape_cast %21 : vector<2x48x16xbf16> to vector<96x16xbf16>
    %23 = vector.extract_strided_slice %1 {offsets = [3, 0, 0], sizes = [1, 16, 128], strides = [1, 1, 1]} : vector<8x16x128xbf16> to vector<1x16x128xbf16>
    %24 = vector.shape_cast %23 : vector<1x16x128xbf16> to vector<16x128xbf16>
    %cst_8 = arith.constant dense<0.000000e+00> : vector<96x128xf32>
    %25 = tpu.matmul %22, %24, %cst_8 {dimension_numbers = #tpu.dot_dimension_numbers<[1], [0], [0], [1], [0, 0, 1, 1], [], []>} : vector<96x16xbf16>, vector<16x128xbf16>, vector<96x128xf32> -> vector<96x128xf32>
    %26 = arith.addf %20, %25 : vector<96x128xf32>
    %27 = vector.extract_strided_slice %0 {offsets = [0, 4, 0], sizes = [2, 48, 16], strides = [1, 1, 1]} : vector<2x56x16xbf16> to vector<2x48x16xbf16>
    %28 = vector.shape_cast %27 : vector<2x48x16xbf16> to vector<96x16xbf16>
    %29 = vector.extract_strided_slice %1 {offsets = [4, 0, 0], sizes = [1, 16, 128], strides = [1, 1, 1]} : vector<8x16x128xbf16> to vector<1x16x128xbf16>
    %30 = vector.shape_cast %29 : vector<1x16x128xbf16> to vector<16x128xbf16>
    %cst_9 = arith.constant dense<0.000000e+00> : vector<96x128xf32>
    %31 = tpu.matmul %28, %30, %cst_9 {dimension_numbers = #tpu.dot_dimension_numbers<[1], [0], [0], [1], [0, 0, 1, 1], [], []>} : vector<96x16xbf16>, vector<16x128xbf16>, vector<96x128xf32> -> vector<96x128xf32>
    %32 = arith.addf %26, %31 : vector<96x128xf32>
    %33 = vector.extract_strided_slice %0 {offsets = [0, 5, 0], sizes = [2, 48, 16], strides = [1, 1, 1]} : vector<2x56x16xbf16> to vector<2x48x16xbf16>
    %34 = vector.shape_cast %33 : vector<2x48x16xbf16> to vector<96x16xbf16>
    %35 = vector.extract_strided_slice %1 {offsets = [5, 0, 0], sizes = [1, 16, 128], strides = [1, 1, 1]} : vector<8x16x128xbf16> to vector<1x16x128xbf16>
    %36 = vector.shape_cast %35 : vector<1x16x128xbf16> to vector<16x128xbf16>
    %cst_10 = arith.constant dense<0.000000e+00> : vector<96x128xf32>
    %37 = tpu.matmul %34, %36, %cst_10 {dimension_numbers = #tpu.dot_dimension_numbers<[1], [0], [0], [1], [0, 0, 1, 1], [], []>} : vector<96x16xbf16>, vector<16x128xbf16>, vector<96x128xf32> -> vector<96x128xf32>
    %38 = arith.addf %32, %37 : vector<96x128xf32>
    %39 = vector.extract_strided_slice %0 {offsets = [0, 6, 0], sizes = [2, 48, 16], strides = [1, 1, 1]} : vector<2x56x16xbf16> to vector<2x48x16xbf16>
    %40 = vector.shape_cast %39 : vector<2x48x16xbf16> to vector<96x16xbf16>
    %41 = vector.extract_strided_slice %1 {offsets = [6, 0, 0], sizes = [1, 16, 128], strides = [1, 1, 1]} : vector<8x16x128xbf16> to vector<1x16x128xbf16>
    %42 = vector.shape_cast %41 : vector<1x16x128xbf16> to vector<16x128xbf16>
    %cst_11 = arith.constant dense<0.000000e+00> : vector<96x128xf32>
    %43 = tpu.matmul %40, %42, %cst_11 {dimension_numbers = #tpu.dot_dimension_numbers<[1], [0], [0], [1], [0, 0, 1, 1], [], []>} : vector<96x16xbf16>, vector<16x128xbf16>, vector<96x128xf32> -> vector<96x128xf32>
    %44 = arith.addf %38, %43 : vector<96x128xf32>
    %45 = vector.extract_strided_slice %0 {offsets = [0, 7, 0], sizes = [2, 48, 16], strides = [1, 1, 1]} : vector<2x56x16xbf16> to vector<2x48x16xbf16>
    %46 = vector.shape_cast %45 : vector<2x48x16xbf16> to vector<96x16xbf16>
    %47 = vector.extract_strided_slice %1 {offsets = [7, 0, 0], sizes = [1, 16, 128], strides = [1, 1, 1]} : vector<8x16x128xbf16> to vector<1x16x128xbf16>
    %48 = vector.shape_cast %47 : vector<1x16x128xbf16> to vector<16x128xbf16>
    %cst_12 = arith.constant dense<0.000000e+00> : vector<96x128xf32>
    %49 = tpu.matmul %46, %48, %cst_12 {dimension_numbers = #tpu.dot_dimension_numbers<[1], [0], [0], [1], [0, 0, 1, 1], [], []>} : vector<96x16xbf16>, vector<16x128xbf16>, vector<96x128xf32> -> vector<96x128xf32>
    %50 = arith.addf %44, %49 : vector<96x128xf32>
    %c0_13 = arith.constant 0 : index
    %c0_14 = arith.constant 0 : index
    %51 = vector.load %arg3[%c0_13, %c0_14] : memref<1x128xf32, #tpu.memory_space<vmem>>, vector<1x128xf32>
    %52 = vector.broadcast %51 : vector<1x128xf32> to vector<96x128xf32>
    %53 = arith.addf %50, %52 : vector<96x128xf32>
    %cst_15 = arith.constant 0.000000e+00 : f32
    %54 = vector.broadcast %cst_15 : f32 to vector<96x128xf32>
    %55 = arith.maximumf %53, %54 : vector<96x128xf32>
    %56 = vector.shape_cast %55 : vector<96x128xf32> to vector<2x48x128xf32>
    %c0_16 = arith.constant 0 : index
    %c0_17 = arith.constant 0 : index
    %57 = vector.load %arg4[%c0_16, %c0_17] : memref<48x128xf32, #tpu.memory_space<vmem>>, vector<48x128xf32>
    %58 = vector.shape_cast %57 : vector<48x128xf32> to vector<1x48x128xf32>
    %59 = vector.broadcast %58 : vector<1x48x128xf32> to vector<2x48x128xf32>
    %60 = arith.mulf %56, %59 : vector<2x48x128xf32>
    %cst_18 = arith.constant dense<0.000000e+00> : vector<2x48xf32>
    %61 = vector.multi_reduction <add>, %60, %cst_18 [2] : vector<2x48x128xf32> to vector<2x48xf32>
    %cst_19 = arith.constant dense<0.000000e+00> : vector<2xf32>
    %62 = vector.multi_reduction <add>, %61, %cst_19 [1] : vector<2x48xf32> to vector<2xf32>
    %63 = vector.shape_cast %62 : vector<2xf32> to vector<2x1xf32>
    %c0_20 = arith.constant 0 : index
    %c0_21 = arith.constant 0 : index
    %64 = memref.load %arg5[%c0_20, %c0_21] : memref<1x1xf32, #tpu.memory_space<smem>>
    %65 = vector.broadcast %64 : f32 to vector<2x1xf32>
    %66 = arith.addf %63, %65 : vector<2x1xf32>
    %67 = vector.shape_cast %66 : vector<2x1xf32> to vector<2x1xf32>
    %68 = vector.broadcast %67 : vector<2x1xf32> to vector<2x128xf32>
    %c0_22 = arith.constant 0 : index
    %c0_23 = arith.constant 0 : index
    %69 = vector.load %arg6[%c0_22, %c0_23] : memref<2x128xf32, #tpu.memory_space<vmem>>, vector<2x128xf32>
    tpu.vector_store %arg6[%c0_22, %c0_23], %68 {strides = array<i32>} : memref<2x128xf32, #tpu.memory_space<vmem>>, vector<2x128xf32>,
    return
  }
  func.func @transform_0(%arg0: i32) -> (i32, i32, i32) {
    %c0_i32 = arith.constant 0 : i32
    %c0_i32_0 = arith.constant 0 : i32
    %c0_i32_1 = arith.constant 0 : i32
    return %arg0, %c0_i32, %c0_i32_0 : i32, i32, i32
  }
  func.func @transform_1(%arg0: i32) -> (i32, i32, i32) {
    %c0_i32 = arith.constant 0 : i32
    %c0_i32_0 = arith.constant 0 : i32
    %c0_i32_1 = arith.constant 0 : i32
    %c0_i32_2 = arith.constant 0 : i32
    return %c0_i32, %c0_i32_0, %c0_i32_1 : i32, i32, i32
  }
  func.func @transform_2(%arg0: i32) -> (i32, i32) {
    %c0_i32 = arith.constant 0 : i32
    %c0_i32_0 = arith.constant 0 : i32
    %c0_i32_1 = arith.constant 0 : i32
    return %c0_i32, %c0_i32_0 : i32, i32
  }
  func.func @transform_3(%arg0: i32) -> (i32, i32) {
    %c0_i32 = arith.constant 0 : i32
    %c0_i32_0 = arith.constant 0 : i32
    %c0_i32_1 = arith.constant 0 : i32
    return %c0_i32, %c0_i32_0 : i32, i32
  }
  func.func @transform_4(%arg0: i32) -> (i32, i32) {
    %c0_i32 = arith.constant 0 : i32
    %c0_i32_0 = arith.constant 0 : i32
    %c0_i32_1 = arith.constant 0 : i32
    return %c0_i32, %c0_i32_0 : i32, i32
  }
  func.func @transform_5(%arg0: i32) -> (i32, i32) {
    %c0_i32 = arith.constant 0 : i32
    %c0_i32_0 = arith.constant 0 : i32
    return %arg0, %c0_i32 : i32, i32
  }
}

</mosaic_0001>

<llo_original>
// kernel: cnn_forward.1
$region0: #{cnn_forward.1}
  #allocation0 [shape = 'u32[]', space=smem, size = 0x4, offset = 0x4, fixed_abs, tag = 'smem constant byte address 0x4 - core index']
  #allocation1 [shape = 'u32[144,128]{1,0:T(1,128)}', space=vmem, size = 0x12000, scoped, tag = 'internal scratch']
  #allocation2 [shape = 'f32[1,1]{1,0:T(1,128)S(6)}', space=smem, size = 0x200, scoped, tag = 'scoped memory for cnn_forward.1']
  %s0 = inlined_call_operand.vmem [shape: bf16[2,56,16], index: 0, kind: input, shape index: {}]
  %s1 = inlined_call_operand.vmem [shape: bf16[8,16,128], index: 1, kind: input, shape index: {}]
  %s2 = inlined_call_operand.vmem [shape: f32[1,128], index: 2, kind: input, shape index: {}]
  %s3 = inlined_call_operand.hbm [shape: f32[48,128], index: 3, kind: input, shape index: {}]
  %s4 = inlined_call_operand.<no memory space> [shape: f32[1,1], index: 4, kind: input, shape index: {}]
  %s5 = inlined_call_operand.vmem [shape: f32[2,128], index: 5, kind: output, shape index: {}]
  %s6 = sld [smem:[#allocation0]]
  $region34: #{cnn_forward.1} parent=0
    _
  %s8 = ssub.s32 1, %s6
  %s9 = scalar_select 0, %s8, %s6
  %10 = sst [smem:[#allocation2]] %s4
  $region1: #{cnn_forward.1} parent=0
    #allocation3 [shape = 'u8[24576]{0}', space=vmem, size = 0x6000, scoped, tag = 'input window, operand 3, single buffered']
    #allocation4 [shape = 's32[1]{0}', space=sflag, size = 0x4, scoped, tag = 'scoped memory for cnn_forward.1']
    %11 = vsyncpa [#allocation4], 0
    // Predicated region
    $region2: #{cnn_forward.1} parent=1 // pred_check
      _
    $region3: #{cnn_forward.1} parent=1 // pred_check_branch
      %13 = sbr.rel (0) target = $region5
    $region4: #{cnn_forward.1} parent=1 // pred_region
      _
    $region5: #{cnn_forward.1} parent=1 // pred_fallthru
      _
    // Predicated region
    $region6: #{cnn_forward.1} parent=1 // pred_check
      _
    $region7: #{cnn_forward.1} parent=1 // pred_check_branch
      %15 = sbr.rel (0) target = $region9
    $region8: #{cnn_forward.1} parent=1 // pred_region
      _
    $region9: #{cnn_forward.1} parent=1 // pred_fallthru
      _
    // Predicated region
    $region10: #{cnn_forward.1} parent=1 // pred_check
      _
    $region11: #{cnn_forward.1} parent=1 // pred_check_branch
      %17 = sbr.rel (0) target = $region13
    $region12: #{cnn_forward.1} parent=1 // pred_region
      _
    $region13: #{cnn_forward.1} parent=1 // pred_fallthru
      _
    // Predicated region
    $region14: #{cnn_forward.1} parent=1 // pred_check
      _
    $region15: #{cnn_forward.1} parent=1 // pred_check_branch
      %19 = sbr.rel (0) target = $region17
    $region16: #{cnn_forward.1} parent=1 // pred_region
      %s21 = ssub.s32 768, 768
      %22 = vsyncadd [#allocation4], %s21
      %s23 = sshll.u32 [#allocation3], 4
      %s24 = int_to_ptr.vmem [resolvable:$true] %s23
      %29 = dma.hbm_to_vmem [thread:$0]  %s3, 768, %s24, [#allocation4], 128, 128, 8
    $region17: #{cnn_forward.1} parent=1 // pred_fallthru
      _
    // Predicated region
    $region18: #{cnn_forward.1} parent=1 // pred_check
      _
    $region19: #{cnn_forward.1} parent=1 // pred_check_branch
      %31 = sbr.rel (0) target = $region21
    $region20: #{cnn_forward.1} parent=1 // pred_region
      _
    $region21: #{cnn_forward.1} parent=1 // pred_fallthru
      _
    // Predicated region
    $region22: #{cnn_forward.1} parent=1 // pred_check
      _
    $region23: #{cnn_forward.1} parent=1 // pred_check_branch
      %33 = sbr.rel (0) target = $region25
    $region24: #{cnn_forward.1} parent=1 // pred_region
      %34 = dma.done [#allocation4], 768
    $region25: #{cnn_forward.1} parent=1 // pred_fallthru
      _
    %v36 = vld [vmem:[%s0] sm:$0xf]
    %v37 = vld [vmem:[%s0 + $0x4] sm:$0xf]
    %v38 = vld [vmem:[%s0 + $0x8] sm:$0xf]
    %v39 = vld [vmem:[%s0 + $0xc] sm:$0xf]
    %v40 = vld [vmem:[%s0 + $0x10] sm:$0xf]
    %v41 = vld [vmem:[%s0 + $0x14] sm:$0xf]
    %v42 = vld [vmem:[%s0 + $0x18] sm:$0xf]
    %v43 = vld [vmem:[%s0 + $0x1c] sm:$0xf]
    %v44 = vld [vmem:[%s0 + $0x20] sm:$0xf]
    %v45 = vld [vmem:[%s0 + $0x24] sm:$0xf]
    %v46 = vld [vmem:[%s0 + $0x28] sm:$0xf]
    %v47 = vld [vmem:[%s0 + $0x2c] sm:$0xf]
    %v48 = vld [vmem:[%s0 + $0x30] sm:$0xf]
    %v49 = vld [vmem:[%s0 + $0x34] sm:$0xf]
    %v50 = vld [vmem:[%s1] sm:$0xf]
    %v51 = vld [vmem:[%s1 + $0x4] sm:$0xf]
    %v52 = vld [vmem:[%s1 + $0x8] sm:$0xf]
    %v53 = vld [vmem:[%s1 + $0xc] sm:$0xf]
    %v54 = vld [vmem:[%s1 + $0x10] sm:$0xf]
    %v55 = vld [vmem:[%s1 + $0x14] sm:$0xf]
    %v56 = vld [vmem:[%s1 + $0x18] sm:$0xf]
    %v57 = vld [vmem:[%s1 + $0x1c] sm:$0xf]
    %v58 = vld [vmem:[%s1 + $0x20] sm:$0xf]
    %v59 = vld [vmem:[%s1 + $0x24] sm:$0xf]
    %v60 = vld [vmem:[%s1 + $0x28] sm:$0xf]
    %v61 = vld [vmem:[%s1 + $0x2c] sm:$0xf]
    %v62 = vld [vmem:[%s1 + $0x30] sm:$0xf]
    %v63 = vld [vmem:[%s1 + $0x34] sm:$0xf]
    %v64 = vld [vmem:[%s1 + $0x38] sm:$0xf]
    %v65 = vld [vmem:[%s1 + $0x3c] sm:$0xf]
    %vm66 = vsmask.f32 3328
    %vm67 = vsmask.f32 7440
    %vm68 = vmor %vm66, %vm67
    %v70 = vshrl.u32 %v36, 16
    %v72 = vrot.slane %v70, 4
    %v73 = vshll.u32 %v36, 16
    %v75 = vrot.slane %v73, 5
    %v76 = vor.u32 %v72, %v75
    %v77 = vrot.slane %v76, 4
    %v79 = vshll.u32 %v37, 16
    %v81 = vrot.slane %v79, 5
    %v82 = vsel %vm68, %v77, %v81
    %v83 = vshrl.u32 %v37, 16
    %v85 = vrot.slane %v83, 4
    %v86 = vor.u32 %v85, %v81
    %v87 = vrot.slane %v86, 4
    %v89 = vshll.u32 %v38, 16
    %v91 = vrot.slane %v89, 5
    %v92 = vsel %vm68, %v87, %v91
    %v93 = vshrl.u32 %v38, 16
    %v95 = vrot.slane %v93, 4
    %v96 = vor.u32 %v95, %v91
    %v97 = vrot.slane %v96, 4
    %v99 = vshll.u32 %v39, 16
    %v101 = vrot.slane %v99, 5
    %v102 = vsel %vm68, %v97, %v101
    %v103 = vshrl.u32 %v39, 16
    %v105 = vrot.slane %v103, 4
    %v106 = vor.u32 %v105, %v101
    %v107 = vrot.slane %v106, 4
    %v109 = vshll.u32 %v40, 16
    %v111 = vrot.slane %v109, 5
    %v112 = vsel %vm68, %v107, %v111
    %v113 = vshrl.u32 %v40, 16
    %v115 = vrot.slane %v113, 4
    %v116 = vor.u32 %v115, %v111
    %v117 = vrot.slane %v116, 4
    %v119 = vshll.u32 %v41, 16
    %v121 = vrot.slane %v119, 5
    %v122 = vsel %vm68, %v117, %v121
    %v123 = vshrl.u32 %v41, 16
    %v125 = vrot.slane %v123, 4
    %v126 = vor.u32 %v125, %v121
    %v127 = vrot.slane %v126, 4
    %v129 = vshll.u32 %v42, 16
    %v131 = vrot.slane %v129, 5
    %v132 = vsel %vm68, %v127, %v131
    %v134 = vshrl.u32 %v43, 16
    %v136 = vrot.slane %v134, 4
    %v137 = vshll.u32 %v43, 16
    %v139 = vrot.slane %v137, 5
    %v140 = vor.u32 %v136, %v139
    %v141 = vrot.slane %v140, 4
    %v143 = vshll.u32 %v44, 16
    %v145 = vrot.slane %v143, 5
    %v146 = vsel %vm68, %v141, %v145
    %v147 = vshrl.u32 %v44, 16
    %v149 = vrot.slane %v147, 4
    %v150 = vor.u32 %v149, %v145
    %v151 = vrot.slane %v150, 4
    %v153 = vshll.u32 %v45, 16
    %v155 = vrot.slane %v153, 5
    %v156 = vsel %vm68, %v151, %v155
    %v157 = vshrl.u32 %v45, 16
    %v159 = vrot.slane %v157, 4
    %v160 = vor.u32 %v159, %v155
    %v161 = vrot.slane %v160, 4
    %v163 = vshll.u32 %v46, 16
    %v165 = vrot.slane %v163, 5
    %v166 = vsel %vm68, %v161, %v165
    %v167 = vshrl.u32 %v46, 16
    %v169 = vrot.slane %v167, 4
    %v170 = vor.u32 %v169, %v165
    %v171 = vrot.slane %v170, 4
    %v173 = vshll.u32 %v47, 16
    %v175 = vrot.slane %v173, 5
    %v176 = vsel %vm68, %v171, %v175
    %v177 = vshrl.u32 %v47, 16
    %v179 = vrot.slane %v177, 4
    %v180 = vor.u32 %v179, %v175
    %v181 = vrot.slane %v180, 4
    %v183 = vshll.u32 %v48, 16
    %v185 = vrot.slane %v183, 5
    %v186 = vsel %vm68, %v181, %v185
    %v187 = vshrl.u32 %v48, 16
    %v189 = vrot.slane %v187, 4
    %v190 = vor.u32 %v189, %v185
    %v191 = vrot.slane %v190, 4
    %v193 = vshll.u32 %v49, 16
    %v195 = vrot.slane %v193, 5
    %v196 = vsel %vm68, %v191, %v195
    %v197 = vunpack.c.l.b16 %v82
    %v198 = vunpack.c.l.b16 %v92
    %v199 = vunpack.c.l.b16 %v102
    %v200 = vunpack.c.l.b16 %v112
    %v201 = vunpack.c.l.b16 %v122
    %v202 = vunpack.c.l.b16 %v132
    %v203 = vunpack.c.l.b16 %v146
    %v204 = vunpack.c.l.b16 %v156
    %v205 = vunpack.c.l.b16 %v166
    %v206 = vunpack.c.l.b16 %v176
    %v207 = vunpack.c.l.b16 %v186
    %v208 = vunpack.c.l.b16 %v196
    %v209 = vpack.c.b16 %v198, %v197
    %v210 = vpack.c.b16 %v200, %v199
    %v211 = vpack.c.b16 %v202, %v201
    %v212 = vpack.c.b16 %v204, %v203
    %v213 = vpack.c.b16 %v206, %v205
    %v214 = vpack.c.b16 %v208, %v207
    %v217 = vunpack.c.l.b16 %v52
    %v218 = vunpack.c.l.b16 %v53
    %v219 = vpack.c.b16 %v218, %v217
    %vm221 = vcmask 130048
    %v223 = vsel %vm221, %v209, 0
    %v226 = vsel %vm221, %v210, 0
    %v229 = vsel %vm221, %v211, 0
    %v232 = vsel %vm221, %v212, 0
    %v235 = vsel %vm221, %v213, 0
    %v238 = vsel %vm221, %v214, 0
    %240 = vmatprep.subr.bf16.mxu0 0
    %241 = vmatpush1.bf16.msra.mxu0 %v219
    %242 = vmatprep.subr.bf16.mxu0 0
    %243 = vmatpush1.bf16.msra.mxu0 0
    %244 = vmatprep.subr.bf16.mxu0 0
    %245 = vmatpush1.bf16.msra.mxu0 0
    %246 = vmatprep.subr.bf16.mxu0 0
    %247 = vmatpush1.bf16.msra.mxu0 0
    %248 = vmatprep.subr.bf16.mxu0 0
    %249 = vmatpush1.bf16.msra.mxu0 0
    %250 = vmatprep.subr.bf16.mxu0 0
    %251 = vmatpush1.bf16.msra.mxu0 0
    %252 = vmatprep.subr.bf16.mxu0 0
    %253 = vmatpush1.bf16.msra.mxu0 0
    %254 = vmatprep.subr.bf16.mxu0 0
    %255 = vmatpush1.bf16.msra.mxu0 0
    %256 = vmatprep.subr.bf16.mxu0 0
    %257 = vmatpush1.bf16.msra.mxu0 0
    %258 = vmatprep.subr.bf16.mxu0 0
    %259 = vmatpush1.bf16.msra.mxu0 0
    %260 = vmatprep.subr.bf16.mxu0 0
    %261 = vmatpush1.bf16.msra.mxu0 0
    %262 = vmatprep.subr.bf16.mxu0 0
    %263 = vmatpush1.bf16.msra.mxu0 0
    %264 = vmatprep.subr.bf16.mxu0 0
    %265 = vmatpush1.bf16.msra.mxu0 0
    %266 = vmatprep.subr.bf16.mxu0 0
    %267 = vmatpush1.bf16.msra.mxu0 0
    %268 = vmatprep.subr.bf16.mxu0 0
    %269 = vmatpush1.bf16.msra.mxu0 0
    %270 = vmatprep.subr.bf16.mxu0 0
    %271 = vmatpush1.bf16.msra.mxu0 0
    %272 = vmatprep.mubr.bf16.mxu0 0
    %273 = vmatmul.mubr.bf16.gmra.mrb[0].mxu0 %v223
    %v274 = vpop.f32.mrb[0].mxu0
    %v275 = vadd.f32 0.0, %v274
    %v276 = vpop.f32.mrb[0].mxu0
    %v277 = vpop.f32.mrb[0].mxu0
    %v278 = vadd.f32 0.0, %v277
    %v279 = vpop.f32.mrb[0].mxu0
    %280 = vmatprep.mubr.bf16.mxu0 0
    %281 = vmatmul.mubr.bf16.gmra.mrb[0].mxu0 %v226
    %v282 = vpop.f32.mrb[0].mxu0
    %v283 = vadd.f32 0.0, %v282
    %v284 = vpop.f32.mrb[0].mxu0
    %v285 = vpop.f32.mrb[0].mxu0
    %v286 = vadd.f32 0.0, %v285
    %v287 = vpop.f32.mrb[0].mxu0
    %288 = vmatprep.mubr.bf16.mxu0 0
    %289 = vmatmul.mubr.bf16.gmra.mrb[0].mxu0 %v229
    %v290 = vpop.f32.mrb[0].mxu0
    %v291 = vadd.f32 0.0, %v290
    %v292 = vpop.f32.mrb[0].mxu0
    %v293 = vpop.f32.mrb[0].mxu0
    %v294 = vadd.f32 0.0, %v293
    %v295 = vpop.f32.mrb[0].mxu0
    %296 = vmatprep.mubr.bf16.mxu0 0
    %297 = vmatmul.mubr.bf16.gmra.mrb[0].mxu0 %v232
    %v298 = vpop.f32.mrb[0].mxu0
    %v299 = vadd.f32 0.0, %v298
    %v300 = vpop.f32.mrb[0].mxu0
    %v301 = vpop.f32.mrb[0].mxu0
    %v302 = vadd.f32 0.0, %v301
    %v303 = vpop.f32.mrb[0].mxu0
    %304 = vmatprep.mubr.bf16.mxu0 0
    %305 = vmatmul.mubr.bf16.gmra.mrb[0].mxu0 %v235
    %v306 = vpop.f32.mrb[0].mxu0
    %v307 = vadd.f32 0.0, %v306
    %v308 = vpop.f32.mrb[0].mxu0
    %v309 = vpop.f32.mrb[0].mxu0
    %v310 = vadd.f32 0.0, %v309
    %v311 = vpop.f32.mrb[0].mxu0
    %312 = vmatprep.mubr.bf16.mxu0 0
    %313 = vmatmul.mubr.bf16.gmra.mrb[0].mxu0 %v238
    %v314 = vpop.f32.mrb[0].mxu0
    %v315 = vadd.f32 0.0, %v314
    %v316 = vpop.f32.mrb[0].mxu0
    %v317 = vpop.f32.mrb[0].mxu0
    %v318 = vadd.f32 0.0, %v317
    %v319 = vpop.f32.mrb[0].mxu0
    %320 = vdwg.mxu0
    %v333 = vunpack.c.l.b16 %v36
    %v334 = vunpack.c.l.b16 %v37
    %v335 = vunpack.c.l.b16 %v38
    %v336 = vunpack.c.l.b16 %v39
    %v337 = vunpack.c.l.b16 %v40
    %v338 = vunpack.c.l.b16 %v41
    %v339 = vunpack.c.l.b16 %v43
    %v340 = vunpack.c.l.b16 %v44
    %v341 = vunpack.c.l.b16 %v45
    %v342 = vunpack.c.l.b16 %v46
    %v343 = vunpack.c.l.b16 %v47
    %v344 = vunpack.c.l.b16 %v48
    %v345 = vpack.c.b16 %v334, %v333
    %v346 = vpack.c.b16 %v336, %v335
    %v347 = vpack.c.b16 %v338, %v337
    %v348 = vpack.c.b16 %v340, %v339
    %v349 = vpack.c.b16 %v342, %v341
    %v350 = vpack.c.b16 %v344, %v343
    %v353 = vunpack.c.l.b16 %v50
    %v354 = vunpack.c.l.b16 %v51
    %v355 = vpack.c.b16 %v354, %v353
    %v358 = vsel %vm221, %v345, 0
    %v361 = vsel %vm221, %v346, 0
    %v364 = vsel %vm221, %v347, 0
    %v367 = vsel %vm221, %v348, 0
    %v370 = vsel %vm221, %v349, 0
    %v373 = vsel %vm221, %v350, 0
    %375 = vmatprep.subr.bf16.mxu0 0
    %376 = vmatpush1.bf16.msra.mxu0 %v355
    %377 = vmatprep.subr.bf16.mxu0 0
    %378 = vmatpush1.bf16.msra.mxu0 0
    %379 = vmatprep.subr.bf16.mxu0 0
    %380 = vmatpush1.bf16.msra.mxu0 0
    %381 = vmatprep.subr.bf16.mxu0 0
    %382 = vmatpush1.bf16.msra.mxu0 0
    %383 = vmatprep.subr.bf16.mxu0 0
    %384 = vmatpush1.bf16.msra.mxu0 0
    %385 = vmatprep.subr.bf16.mxu0 0
    %386 = vmatpush1.bf16.msra.mxu0 0
    %387 = vmatprep.subr.bf16.mxu0 0
    %388 = vmatpush1.bf16.msra.mxu0 0
    %389 = vmatprep.subr.bf16.mxu0 0
    %390 = vmatpush1.bf16.msra.mxu0 0
    %391 = vmatprep.subr.bf16.mxu0 0
    %392 = vmatpush1.bf16.msra.mxu0 0
    %393 = vmatprep.subr.bf16.mxu0 0
    %394 = vmatpush1.bf16.msra.mxu0 0
    %395 = vmatprep.subr.bf16.mxu0 0
    %396 = vmatpush1.bf16.msra.mxu0 0
    %397 = vmatprep.subr.bf16.mxu0 0
    %398 = vmatpush1.bf16.msra.mxu0 0
    %399 = vmatprep.subr.bf16.mxu0 0
    %400 = vmatpush1.bf16.msra.mxu0 0
    %401 = vmatprep.subr.bf16.mxu0 0
    %402 = vmatpush1.bf16.msra.mxu0 0
    %403 = vmatprep.subr.bf16.mxu0 0
    %404 = vmatpush1.bf16.msra.mxu0 0
    %405 = vmatprep.subr.bf16.mxu0 0
    %406 = vmatpush1.bf16.msra.mxu0 0
    %407 = vmatprep.mubr.bf16.mxu0 0
    %408 = vmatmul.mubr.bf16.gmra.mrb[0].mxu0 %v358
    %v409 = vpop.f32.mrb[0].mxu0
    %v410 = vadd.f32 %v275, %v409
    %v411 = vpop.f32.mrb[0].mxu0
    %v412 = vpop.f32.mrb[0].mxu0
    %v413 = vadd.f32 %v278, %v412
    %v414 = vpop.f32.mrb[0].mxu0
    %415 = vmatprep.mubr.bf16.mxu0 0
    %416 = vmatmul.mubr.bf16.gmra.mrb[0].mxu0 %v361
    %v417 = vpop.f32.mrb[0].mxu0
    %v418 = vadd.f32 %v283, %v417
    %v419 = vpop.f32.mrb[0].mxu0
    %v420 = vpop.f32.mrb[0].mxu0
    %v421 = vadd.f32 %v286, %v420
    %v422 = vpop.f32.mrb[0].mxu0
    %423 = vmatprep.mubr.bf16.mxu0 0
    %424 = vmatmul.mubr.bf16.gmra.mrb[0].mxu0 %v364
    %v425 = vpop.f32.mrb[0].mxu0
    %v426 = vadd.f32 %v291, %v425
    %v427 = vpop.f32.mrb[0].mxu0
    %v428 = vpop.f32.mrb[0].mxu0
    %v429 = vadd.f32 %v294, %v428
    %v430 = vpop.f32.mrb[0].mxu0
    %431 = vmatprep.mubr.bf16.mxu0 0
    %432 = vmatmul.mubr.bf16.gmra.mrb[0].mxu0 %v367
    %v433 = vpop.f32.mrb[0].mxu0
    %v434 = vadd.f32 %v299, %v433
    %v435 = vpop.f32.mrb[0].mxu0
    %v436 = vpop.f32.mrb[0].mxu0
    %v437 = vadd.f32 %v302, %v436
    %v438 = vpop.f32.mrb[0].mxu0
    %439 = vmatprep.mubr.bf16.mxu0 0
    %440 = vmatmul.mubr.bf16.gmra.mrb[0].mxu0 %v370
    %v441 = vpop.f32.mrb[0].mxu0
    %v442 = vadd.f32 %v307, %v441
    %v443 = vpop.f32.mrb[0].mxu0
    %v444 = vpop.f32.mrb[0].mxu0
    %v445 = vadd.f32 %v310, %v444
    %v446 = vpop.f32.mrb[0].mxu0
    %447 = vmatprep.mubr.bf16.mxu0 0
    %448 = vmatmul.mubr.bf16.gmra.mrb[0].mxu0 %v373
    %v449 = vpop.f32.mrb[0].mxu0
    %v450 = vadd.f32 %v315, %v449
    %v451 = vpop.f32.mrb[0].mxu0
    %v452 = vpop.f32.mrb[0].mxu0
    %v453 = vadd.f32 %v318, %v452
    %v454 = vpop.f32.mrb[0].mxu0
    %455 = vdwg.mxu0
    %vm458 = vcmask 1042432
    %vm459 = vcmask 1046532
    %vm460 = vmor %vm458, %vm459
    %v461 = vrot.slane %v36, 5
    %v462 = vrot.slane %v461, 4
    %v463 = vrot.slane %v37, 5
    %v464 = vsel %vm460, %v462, %v463
    %v465 = vrot.slane %v463, 4
    %v466 = vrot.slane %v38, 5
    %v467 = vsel %vm460, %v465, %v466
    %v468 = vrot.slane %v466, 4
    %v469 = vrot.slane %v39, 5
    %v470 = vsel %vm460, %v468, %v469
    %v471 = vrot.slane %v469, 4
    %v472 = vrot.slane %v40, 5
    %v473 = vsel %vm460, %v471, %v472
    %v474 = vrot.slane %v472, 4
    %v475 = vrot.slane %v41, 5
    %v476 = vsel %vm460, %v474, %v475
    %v477 = vrot.slane %v475, 4
    %v478 = vrot.slane %v42, 5
    %v479 = vsel %vm460, %v477, %v478
    %v480 = vrot.slane %v43, 5
    %v481 = vrot.slane %v480, 4
    %v482 = vrot.slane %v44, 5
    %v483 = vsel %vm460, %v481, %v482
    %v484 = vrot.slane %v482, 4
    %v485 = vrot.slane %v45, 5
    %v486 = vsel %vm460, %v484, %v485
    %v487 = vrot.slane %v485, 4
    %v488 = vrot.slane %v46, 5
    %v489 = vsel %vm460, %v487, %v488
    %v490 = vrot.slane %v488, 4
    %v491 = vrot.slane %v47, 5
    %v492 = vsel %vm460, %v490, %v491
    %v493 = vrot.slane %v491, 4
    %v494 = vrot.slane %v48, 5
    %v495 = vsel %vm460, %v493, %v494
    %v496 = vrot.slane %v494, 4
    %v497 = vrot.slane %v49, 5
    %v498 = vsel %vm460, %v496, %v497
    %v499 = vunpack.c.l.b16 %v464
    %v500 = vunpack.c.l.b16 %v467
    %v501 = vunpack.c.l.b16 %v470
    %v502 = vunpack.c.l.b16 %v473
    %v503 = vunpack.c.l.b16 %v476
    %v504 = vunpack.c.l.b16 %v479
    %v505 = vunpack.c.l.b16 %v483
    %v506 = vunpack.c.l.b16 %v486
    %v507 = vunpack.c.l.b16 %v489
    %v508 = vunpack.c.l.b16 %v492
    %v509 = vunpack.c.l.b16 %v495
    %v510 = vunpack.c.l.b16 %v498
    %v511 = vpack.c.b16 %v500, %v499
    %v512 = vpack.c.b16 %v502, %v501
    %v513 = vpack.c.b16 %v504, %v503
    %v514 = vpack.c.b16 %v506, %v505
    %v515 = vpack.c.b16 %v508, %v507
    %v516 = vpack.c.b16 %v510, %v509
    %v519 = vunpack.c.l.b16 %v54
    %v520 = vunpack.c.l.b16 %v55
    %v521 = vpack.c.b16 %v520, %v519
    %v524 = vsel %vm221, %v511, 0
    %v527 = vsel %vm221, %v512, 0
    %v530 = vsel %vm221, %v513, 0
    %v533 = vsel %vm221, %v514, 0
    %v536 = vsel %vm221, %v515, 0
    %v539 = vsel %vm221, %v516, 0
    %541 = vmatprep.subr.bf16.mxu0 0
    %542 = vmatpush1.bf16.msra.mxu0 %v521
    %543 = vmatprep.subr.bf16.mxu0 0
    %544 = vmatpush1.bf16.msra.mxu0 0
    %545 = vmatprep.subr.bf16.mxu0 0
    %546 = vmatpush1.bf16.msra.mxu0 0
    %547 = vmatprep.subr.bf16.mxu0 0
    %548 = vmatpush1.bf16.msra.mxu0 0
    %549 = vmatprep.subr.bf16.mxu0 0
    %550 = vmatpush1.bf16.msra.mxu0 0
    %551 = vmatprep.subr.bf16.mxu0 0
    %552 = vmatpush1.bf16.msra.mxu0 0
    %553 = vmatprep.subr.bf16.mxu0 0
    %554 = vmatpush1.bf16.msra.mxu0 0
    %555 = vmatprep.subr.bf16.mxu0 0
    %556 = vmatpush1.bf16.msra.mxu0 0
    %557 = vmatprep.subr.bf16.mxu0 0
    %558 = vmatpush1.bf16.msra.mxu0 0
    %559 = vmatprep.subr.bf16.mxu0 0
    %560 = vmatpush1.bf16.msra.mxu0 0
    %561 = vmatprep.subr.bf16.mxu0 0
    %562 = vmatpush1.bf16.msra.mxu0 0
    %563 = vmatprep.subr.bf16.mxu0 0
    %564 = vmatpush1.bf16.msra.mxu0 0
    %565 = vmatprep.subr.bf16.mxu0 0
    %566 = vmatpush1.bf16.msra.mxu0 0
    %567 = vmatprep.subr.bf16.mxu0 0
    %568 = vmatpush1.bf16.msra.mxu0 0
    %569 = vmatprep.subr.bf16.mxu0 0
    %570 = vmatpush1.bf16.msra.mxu0 0
    %571 = vmatprep.subr.bf16.mxu0 0
    %572 = vmatpush1.bf16.msra.mxu0 0
    %573 = vmatprep.mubr.bf16.mxu0 0
    %574 = vmatmul.mubr.bf16.gmra.mrb[0].mxu0 %v524
    %v575 = vpop.f32.mrb[0].mxu0
    %v576 = vadd.f32 0.0, %v575
    %v577 = vpop.f32.mrb[0].mxu0
    %v578 = vpop.f32.mrb[0].mxu0
    %v579 = vadd.f32 0.0, %v578
    %v580 = vpop.f32.mrb[0].mxu0
    %581 = vmatprep.mubr.bf16.mxu0 0
    %582 = vmatmul.mubr.bf16.gmra.mrb[0].mxu0 %v527
    %v583 = vpop.f32.mrb[0].mxu0
    %v584 = vadd.f32 0.0, %v583
    %v585 = vpop.f32.mrb[0].mxu0
    %v586 = vpop.f32.mrb[0].mxu0
    %v587 = vadd.f32 0.0, %v586
    %v588 = vpop.f32.mrb[0].mxu0
    %589 = vmatprep.mubr.bf16.mxu0 0
    %590 = vmatmul.mubr.bf16.gmra.mrb[0].mxu0 %v530
    %v591 = vpop.f32.mrb[0].mxu0
    %v592 = vadd.f32 0.0, %v591
    %v593 = vpop.f32.mrb[0].mxu0
    %v594 = vpop.f32.mrb[0].mxu0
    %v595 = vadd.f32 0.0, %v594
    %v596 = vpop.f32.mrb[0].mxu0
    %597 = vmatprep.mubr.bf16.mxu0 0
    %598 = vmatmul.mubr.bf16.gmra.mrb[0].mxu0 %v533
    %v599 = vpop.f32.mrb[0].mxu0
    %v600 = vadd.f32 0.0, %v599
    %v601 = vpop.f32.mrb[0].mxu0
    %v602 = vpop.f32.mrb[0].mxu0
    %v603 = vadd.f32 0.0, %v602
    %v604 = vpop.f32.mrb[0].mxu0
    %605 = vmatprep.mubr.bf16.mxu0 0
    %606 = vmatmul.mubr.bf16.gmra.mrb[0].mxu0 %v536
    %v607 = vpop.f32.mrb[0].mxu0
    %v608 = vadd.f32 0.0, %v607
    %v609 = vpop.f32.mrb[0].mxu0
    %v610 = vpop.f32.mrb[0].mxu0
    %v611 = vadd.f32 0.0, %v610
    %v612 = vpop.f32.mrb[0].mxu0
    %613 = vmatprep.mubr.bf16.mxu0 0
    %614 = vmatmul.mubr.bf16.gmra.mrb[0].mxu0 %v539
    %v615 = vpop.f32.mrb[0].mxu0
    %v616 = vadd.f32 0.0, %v615
    %v617 = vpop.f32.mrb[0].mxu0
    %v618 = vpop.f32.mrb[0].mxu0
    %v619 = vadd.f32 0.0, %v618
    %v620 = vpop.f32.mrb[0].mxu0
    %621 = vdwg.mxu0
    %v622 = vadd.f32 %v410, %v576
    %v623 = vadd.f32 %v413, %v579
    %v624 = vadd.f32 %v418, %v584
    %v625 = vadd.f32 %v421, %v587
    %v626 = vadd.f32 %v426, %v592
    %v627 = vadd.f32 %v429, %v595
    %v628 = vadd.f32 %v434, %v600
    %v629 = vadd.f32 %v437, %v603
    %v630 = vadd.f32 %v442, %v608
    %v631 = vadd.f32 %v445, %v611
    %v632 = vadd.f32 %v450, %v616
    %v633 = vadd.f32 %v453, %v619
    %vm634 = vsmask.f32 2304
    %vm635 = vsmask.f32 6416
    %vm636 = vmor %vm634, %vm635
    %v637 = vrot.slane %v70, 5
    %v638 = vrot.slane %v73, 6
    %v639 = vor.u32 %v637, %v638
    %v640 = vrot.slane %v639, 4
    %v641 = vrot.slane %v83, 5
    %v642 = vrot.slane %v79, 6
    %v643 = vor.u32 %v641, %v642
    %v644 = vsel %vm636, %v640, %v643
    %v645 = vrot.slane %v643, 4
    %v646 = vrot.slane %v93, 5
    %v647 = vrot.slane %v89, 6
    %v648 = vor.u32 %v646, %v647
    %v649 = vsel %vm636, %v645, %v648
    %v650 = vrot.slane %v648, 4
    %v651 = vrot.slane %v103, 5
    %v652 = vrot.slane %v99, 6
    %v653 = vor.u32 %v651, %v652
    %v654 = vsel %vm636, %v650, %v653
    %v655 = vrot.slane %v653, 4
    %v656 = vrot.slane %v113, 5
    %v657 = vrot.slane %v109, 6
    %v658 = vor.u32 %v656, %v657
    %v659 = vsel %vm636, %v655, %v658
    %v660 = vrot.slane %v658, 4
    %v661 = vrot.slane %v123, 5
    %v662 = vrot.slane %v119, 6
    %v663 = vor.u32 %v661, %v662
    %v664 = vsel %vm636, %v660, %v663
    %v665 = vrot.slane %v663, 4
    %v666 = vshrl.u32 %v42, 16
    %v668 = vrot.slane %v666, 5
    %v669 = vrot.slane %v129, 6
    %v670 = vor.u32 %v668, %v669
    %v671 = vsel %vm636, %v665, %v670
    %v672 = vrot.slane %v134, 5
    %v673 = vrot.slane %v137, 6
    %v674 = vor.u32 %v672, %v673
    %v675 = vrot.slane %v674, 4
    %v676 = vrot.slane %v147, 5
    %v677 = vrot.slane %v143, 6
    %v678 = vor.u32 %v676, %v677
    %v679 = vsel %vm636, %v675, %v678
    %v680 = vrot.slane %v678, 4
    %v681 = vrot.slane %v157, 5
    %v682 = vrot.slane %v153, 6
    %v683 = vor.u32 %v681, %v682
    %v684 = vsel %vm636, %v680, %v683
    %v685 = vrot.slane %v683, 4
    %v686 = vrot.slane %v167, 5
    %v687 = vrot.slane %v163, 6
    %v688 = vor.u32 %v686, %v687
    %v689 = vsel %vm636, %v685, %v688
    %v690 = vrot.slane %v688, 4
    %v691 = vrot.slane %v177, 5
    %v692 = vrot.slane %v173, 6
    %v693 = vor.u32 %v691, %v692
    %v694 = vsel %vm636, %v690, %v693
    %v695 = vrot.slane %v693, 4
    %v696 = vrot.slane %v187, 5
    %v697 = vrot.slane %v183, 6
    %v698 = vor.u32 %v696, %v697
    %v699 = vsel %vm636, %v695, %v698
    %v700 = vrot.slane %v698, 4
    %v701 = vshrl.u32 %v49, 16
    %v703 = vrot.slane %v701, 5
    %v704 = vrot.slane %v193, 6
    %v705 = vor.u32 %v703, %v704
    %v706 = vsel %vm636, %v700, %v705
    %v707 = vunpack.c.l.b16 %v644
    %v708 = vunpack.c.l.b16 %v649
    %v709 = vunpack.c.l.b16 %v654
    %v710 = vunpack.c.l.b16 %v659
    %v711 = vunpack.c.l.b16 %v664
    %v712 = vunpack.c.l.b16 %v671
    %v713 = vunpack.c.l.b16 %v679
    %v714 = vunpack.c.l.b16 %v684
    %v715 = vunpack.c.l.b16 %v689
    %v716 = vunpack.c.l.b16 %v694
    %v717 = vunpack.c.l.b16 %v699
    %v718 = vunpack.c.l.b16 %v706
    %v719 = vpack.c.b16 %v708, %v707
    %v720 = vpack.c.b16 %v710, %v709
    %v721 = vpack.c.b16 %v712, %v711
    %v722 = vpack.c.b16 %v714, %v713
    %v723 = vpack.c.b16 %v716, %v715
    %v724 = vpack.c.b16 %v718, %v717
    %v727 = vunpack.c.l.b16 %v56
    %v728 = vunpack.c.l.b16 %v57
    %v729 = vpack.c.b16 %v728, %v727
    %v732 = vsel %vm221, %v719, 0
    %v735 = vsel %vm221, %v720, 0
    %v738 = vsel %vm221, %v721, 0
    %v741 = vsel %vm221, %v722, 0
    %v744 = vsel %vm221, %v723, 0
    %v747 = vsel %vm221, %v724, 0
    %749 = vmatprep.subr.bf16.mxu0 0
    %750 = vmatpush1.bf16.msra.mxu0 %v729
    %751 = vmatprep.subr.bf16.mxu0 0
    %752 = vmatpush1.bf16.msra.mxu0 0
    %753 = vmatprep.subr.bf16.mxu0 0
    %754 = vmatpush1.bf16.msra.mxu0 0
    %755 = vmatprep.subr.bf16.mxu0 0
    %756 = vmatpush1.bf16.msra.mxu0 0
    %757 = vmatprep.subr.bf16.mxu0 0
    %758 = vmatpush1.bf16.msra.mxu0 0
    %759 = vmatprep.subr.bf16.mxu0 0
    %760 = vmatpush1.bf16.msra.mxu0 0
    %761 = vmatprep.subr.bf16.mxu0 0
    %762 = vmatpush1.bf16.msra.mxu0 0
    %763 = vmatprep.subr.bf16.mxu0 0
    %764 = vmatpush1.bf16.msra.mxu0 0
    %765 = vmatprep.subr.bf16.mxu0 0
    %766 = vmatpush1.bf16.msra.mxu0 0
    %767 = vmatprep.subr.bf16.mxu0 0
    %768 = vmatpush1.bf16.msra.mxu0 0
    %769 = vmatprep.subr.bf16.mxu0 0
    %770 = vmatpush1.bf16.msra.mxu0 0
    %771 = vmatprep.subr.bf16.mxu0 0
    %772 = vmatpush1.bf16.msra.mxu0 0
    %773 = vmatprep.subr.bf16.mxu0 0
    %774 = vmatpush1.bf16.msra.mxu0 0
    %775 = vmatprep.subr.bf16.mxu0 0
    %776 = vmatpush1.bf16.msra.mxu0 0
    %777 = vmatprep.subr.bf16.mxu0 0
    %778 = vmatpush1.bf16.msra.mxu0 0
    %779 = vmatprep.subr.bf16.mxu0 0
    %780 = vmatpush1.bf16.msra.mxu0 0
    %781 = vmatprep.mubr.bf16.mxu0 0
    %782 = vmatmul.mubr.bf16.gmra.mrb[0].mxu0 %v732
    %v783 = vpop.f32.mrb[0].mxu0
    %v784 = vadd.f32 0.0, %v783
    %v785 = vpop.f32.mrb[0].mxu0
    %v786 = vpop.f32.mrb[0].mxu0
    %v787 = vadd.f32 0.0, %v786
    %v788 = vpop.f32.mrb[0].mxu0
    %789 = vmatprep.mubr.bf16.mxu0 0
    %790 = vmatmul.mubr.bf16.gmra.mrb[0].mxu0 %v735
    %v791 = vpop.f32.mrb[0].mxu0
    %v792 = vadd.f32 0.0, %v791
    %v793 = vpop.f32.mrb[0].mxu0
    %v794 = vpop.f32.mrb[0].mxu0
    %v795 = vadd.f32 0.0, %v794
    %v796 = vpop.f32.mrb[0].mxu0
    %797 = vmatprep.mubr.bf16.mxu0 0
    %798 = vmatmul.mubr.bf16.gmra.mrb[0].mxu0 %v738
    %v799 = vpop.f32.mrb[0].mxu0
    %v800 = vadd.f32 0.0, %v799
    %v801 = vpop.f32.mrb[0].mxu0
    %v802 = vpop.f32.mrb[0].mxu0
    %v803 = vadd.f32 0.0, %v802
    %v804 = vpop.f32.mrb[0].mxu0
    %805 = vmatprep.mubr.bf16.mxu0 0
    %806 = vmatmul.mubr.bf16.gmra.mrb[0].mxu0 %v741
    %v807 = vpop.f32.mrb[0].mxu0
    %v808 = vadd.f32 0.0, %v807
    %v809 = vpop.f32.mrb[0].mxu0
    %v810 = vpop.f32.mrb[0].mxu0
    %v811 = vadd.f32 0.0, %v810
    %v812 = vpop.f32.mrb[0].mxu0
    %813 = vmatprep.mubr.bf16.mxu0 0
    %814 = vmatmul.mubr.bf16.gmra.mrb[0].mxu0 %v744
    %v815 = vpop.f32.mrb[0].mxu0
    %v816 = vadd.f32 0.0, %v815
    %v817 = vpop.f32.mrb[0].mxu0
    %v818 = vpop.f32.mrb[0].mxu0
    %v819 = vadd.f32 0.0, %v818
    %v820 = vpop.f32.mrb[0].mxu0
    %821 = vmatprep.mubr.bf16.mxu0 0
    %822 = vmatmul.mubr.bf16.gmra.mrb[0].mxu0 %v747
    %v823 = vpop.f32.mrb[0].mxu0
    %v824 = vadd.f32 0.0, %v823
    %v825 = vpop.f32.mrb[0].mxu0
    %v826 = vpop.f32.mrb[0].mxu0
    %v827 = vadd.f32 0.0, %v826
    %v828 = vpop.f32.mrb[0].mxu0
    %829 = vdwg.mxu0
    %v830 = vadd.f32 %v622, %v784
    %v831 = vadd.f32 %v623, %v787
    %v832 = vadd.f32 %v624, %v792
    %v833 = vadd.f32 %v625, %v795
    %v834 = vadd.f32 %v626, %v800
    %v835 = vadd.f32 %v627, %v803
    %v836 = vadd.f32 %v628, %v808
    %v837 = vadd.f32 %v629, %v811
    %v838 = vadd.f32 %v630, %v816
    %v839 = vadd.f32 %v631, %v819
    %v840 = vadd.f32 %v632, %v824
    %v841 = vadd.f32 %v633, %v827
    %vm842 = vcmask 1041408
    %vm843 = vcmask 1045508
    %vm844 = vmor %vm842, %vm843
    %v845 = vrot.slane %v36, 6
    %v846 = vrot.slane %v845, 4
    %v847 = vrot.slane %v37, 6
    %v848 = vsel %vm844, %v846, %v847
    %v849 = vrot.slane %v847, 4
    %v850 = vrot.slane %v38, 6
    %v851 = vsel %vm844, %v849, %v850
    %v852 = vrot.slane %v850, 4
    %v853 = vrot.slane %v39, 6
    %v854 = vsel %vm844, %v852, %v853
    %v855 = vrot.slane %v853, 4
    %v856 = vrot.slane %v40, 6
    %v857 = vsel %vm844, %v855, %v856
    %v858 = vrot.slane %v856, 4
    %v859 = vrot.slane %v41, 6
    %v860 = vsel %vm844, %v858, %v859
    %v861 = vrot.slane %v859, 4
    %v862 = vrot.slane %v42, 6
    %v863 = vsel %vm844, %v861, %v862
    %v864 = vrot.slane %v43, 6
    %v865 = vrot.slane %v864, 4
    %v866 = vrot.slane %v44, 6
    %v867 = vsel %vm844, %v865, %v866
    %v868 = vrot.slane %v866, 4
    %v869 = vrot.slane %v45, 6
    %v870 = vsel %vm844, %v868, %v869
    %v871 = vrot.slane %v869, 4
    %v872 = vrot.slane %v46, 6
    %v873 = vsel %vm844, %v871, %v872
    %v874 = vrot.slane %v872, 4
    %v875 = vrot.slane %v47, 6
    %v876 = vsel %vm844, %v874, %v875
    %v877 = vrot.slane %v875, 4
    %v878 = vrot.slane %v48, 6
    %v879 = vsel %vm844, %v877, %v878
    %v880 = vrot.slane %v878, 4
    %v881 = vrot.slane %v49, 6
    %v882 = vsel %vm844, %v880, %v881
    %v883 = vunpack.c.l.b16 %v848
    %v884 = vunpack.c.l.b16 %v851
    %v885 = vunpack.c.l.b16 %v854
    %v886 = vunpack.c.l.b16 %v857
    %v887 = vunpack.c.l.b16 %v860
    %v888 = vunpack.c.l.b16 %v863
    %v889 = vunpack.c.l.b16 %v867
    %v890 = vunpack.c.l.b16 %v870
    %v891 = vunpack.c.l.b16 %v873
    %v892 = vunpack.c.l.b16 %v876
    %v893 = vunpack.c.l.b16 %v879
    %v894 = vunpack.c.l.b16 %v882
    %v895 = vpack.c.b16 %v884, %v883
    %v896 = vpack.c.b16 %v886, %v885
    %v897 = vpack.c.b16 %v888, %v887
    %v898 = vpack.c.b16 %v890, %v889
    %v899 = vpack.c.b16 %v892, %v891
    %v900 = vpack.c.b16 %v894, %v893
    %v903 = vunpack.c.l.b16 %v58
    %v904 = vunpack.c.l.b16 %v59
    %v905 = vpack.c.b16 %v904, %v903
    %v908 = vsel %vm221, %v895, 0
    %v911 = vsel %vm221, %v896, 0
    %v914 = vsel %vm221, %v897, 0
    %v917 = vsel %vm221, %v898, 0
    %v920 = vsel %vm221, %v899, 0
    %v923 = vsel %vm221, %v900, 0
    %925 = vmatprep.subr.bf16.mxu0 0
    %926 = vmatpush1.bf16.msra.mxu0 %v905
    %927 = vmatprep.subr.bf16.mxu0 0
    %928 = vmatpush1.bf16.msra.mxu0 0
    %929 = vmatprep.subr.bf16.mxu0 0
    %930 = vmatpush1.bf16.msra.mxu0 0
    %931 = vmatprep.subr.bf16.mxu0 0
    %932 = vmatpush1.bf16.msra.mxu0 0
    %933 = vmatprep.subr.bf16.mxu0 0
    %934 = vmatpush1.bf16.msra.mxu0 0
    %935 = vmatprep.subr.bf16.mxu0 0
    %936 = vmatpush1.bf16.msra.mxu0 0
    %937 = vmatprep.subr.bf16.mxu0 0
    %938 = vmatpush1.bf16.msra.mxu0 0
    %939 = vmatprep.subr.bf16.mxu0 0
    %940 = vmatpush1.bf16.msra.mxu0 0
    %941 = vmatprep.subr.bf16.mxu0 0
    %942 = vmatpush1.bf16.msra.mxu0 0
    %943 = vmatprep.subr.bf16.mxu0 0
    %944 = vmatpush1.bf16.msra.mxu0 0
    %945 = vmatprep.subr.bf16.mxu0 0
    %946 = vmatpush1.bf16.msra.mxu0 0
    %947 = vmatprep.subr.bf16.mxu0 0
    %948 = vmatpush1.bf16.msra.mxu0 0
    %949 = vmatprep.subr.bf16.mxu0 0
    %950 = vmatpush1.bf16.msra.mxu0 0
    %951 = vmatprep.subr.bf16.mxu0 0
    %952 = vmatpush1.bf16.msra.mxu0 0
    %953 = vmatprep.subr.bf16.mxu0 0
    %954 = vmatpush1.bf16.msra.mxu0 0
    %955 = vmatprep.subr.bf16.mxu0 0
    %956 = vmatpush1.bf16.msra.mxu0 0
    %957 = vmatprep.mubr.bf16.mxu0 0
    %958 = vmatmul.mubr.bf16.gmra.mrb[0].mxu0 %v908
    %v959 = vpop.f32.mrb[0].mxu0
    %v960 = vadd.f32 0.0, %v959
    %v961 = vpop.f32.mrb[0].mxu0
    %v962 = vpop.f32.mrb[0].mxu0
    %v963 = vadd.f32 0.0, %v962
    %v964 = vpop.f32.mrb[0].mxu0
    %965 = vmatprep.mubr.bf16.mxu0 0
    %966 = vmatmul.mubr.bf16.gmra.mrb[0].mxu0 %v911
    %v967 = vpop.f32.mrb[0].mxu0
    %v968 = vadd.f32 0.0, %v967
    %v969 = vpop.f32.mrb[0].mxu0
    %v970 = vpop.f32.mrb[0].mxu0
    %v971 = vadd.f32 0.0, %v970
    %v972 = vpop.f32.mrb[0].mxu0
    %973 = vmatprep.mubr.bf16.mxu0 0
    %974 = vmatmul.mubr.bf16.gmra.mrb[0].mxu0 %v914
    %v975 = vpop.f32.mrb[0].mxu0
    %v976 = vadd.f32 0.0, %v975
    %v977 = vpop.f32.mrb[0].mxu0
    %v978 = vpop.f32.mrb[0].mxu0
    %v979 = vadd.f32 0.0, %v978
    %v980 = vpop.f32.mrb[0].mxu0
    %981 = vmatprep.mubr.bf16.mxu0 0
    %982 = vmatmul.mubr.bf16.gmra.mrb[0].mxu0 %v917
    %v983 = vpop.f32.mrb[0].mxu0
    %v984 = vadd.f32 0.0, %v983
    %v985 = vpop.f32.mrb[0].mxu0
    %v986 = vpop.f32.mrb[0].mxu0
    %v987 = vadd.f32 0.0, %v986
    %v988 = vpop.f32.mrb[0].mxu0
    %989 = vmatprep.mubr.bf16.mxu0 0
    %990 = vmatmul.mubr.bf16.gmra.mrb[0].mxu0 %v920
    %v991 = vpop.f32.mrb[0].mxu0
    %v992 = vadd.f32 0.0, %v991
    %v993 = vpop.f32.mrb[0].mxu0
    %v994 = vpop.f32.mrb[0].mxu0
    %v995 = vadd.f32 0.0, %v994
    %v996 = vpop.f32.mrb[0].mxu0
    %997 = vmatprep.mubr.bf16.mxu0 0
    %998 = vmatmul.mubr.bf16.gmra.mrb[0].mxu0 %v923
    %v999 = vpop.f32.mrb[0].mxu0
    %v1000 = vadd.f32 0.0, %v999
    %v1001 = vpop.f32.mrb[0].mxu0
    %v1002 = vpop.f32.mrb[0].mxu0
    %v1003 = vadd.f32 0.0, %v1002
    %v1004 = vpop.f32.mrb[0].mxu0
    %1005 = vdwg.mxu0
    %v1006 = vadd.f32 %v830, %v960
    %v1007 = vadd.f32 %v831, %v963
    %v1008 = vadd.f32 %v832, %v968
    %v1009 = vadd.f32 %v833, %v971
    %v1010 = vadd.f32 %v834, %v976
    %v1011 = vadd.f32 %v835, %v979
    %v1012 = vadd.f32 %v836, %v984
    %v1013 = vadd.f32 %v837, %v987
    %v1014 = vadd.f32 %v838, %v992
    %v1015 = vadd.f32 %v839, %v995
    %v1016 = vadd.f32 %v840, %v1000
    %v1017 = vadd.f32 %v841, %v1003
    %vm1018 = vsmask.f32 1280
    %vm1019 = vsmask.f32 5392
    %vm1020 = vmor %vm1018, %vm1019
    %v1021 = vrot.slane %v70, 6
    %v1022 = vrot.slane %v73, 7
    %v1023 = vor.u32 %v1021, %v1022
    %v1024 = vrot.slane %v1023, 4
    %v1025 = vrot.slane %v83, 6
    %v1026 = vrot.slane %v79, 7
    %v1027 = vor.u32 %v1025, %v1026
    %v1028 = vsel %vm1020, %v1024, %v1027
    %v1029 = vrot.slane %v1027, 4
    %v1030 = vrot.slane %v93, 6
    %v1031 = vrot.slane %v89, 7
    %v1032 = vor.u32 %v1030, %v1031
    %v1033 = vsel %vm1020, %v1029, %v1032
    %v1034 = vrot.slane %v1032, 4
    %v1035 = vrot.slane %v103, 6
    %v1036 = vrot.slane %v99, 7
    %v1037 = vor.u32 %v1035, %v1036
    %v1038 = vsel %vm1020, %v1034, %v1037
    %v1039 = vrot.slane %v1037, 4
    %v1040 = vrot.slane %v113, 6
    %v1041 = vrot.slane %v109, 7
    %v1042 = vor.u32 %v1040, %v1041
    %v1043 = vsel %vm1020, %v1039, %v1042
    %v1044 = vrot.slane %v1042, 4
    %v1045 = vrot.slane %v123, 6
    %v1046 = vrot.slane %v119, 7
    %v1047 = vor.u32 %v1045, %v1046
    %v1048 = vsel %vm1020, %v1044, %v1047
    %v1049 = vrot.slane %v1047, 4
    %v1050 = vrot.slane %v666, 6
    %v1051 = vrot.slane %v129, 7
    %v1052 = vor.u32 %v1050, %v1051
    %v1053 = vsel %vm1020, %v1049, %v1052
    %v1054 = vrot.slane %v134, 6
    %v1055 = vrot.slane %v137, 7
    %v1056 = vor.u32 %v1054, %v1055
    %v1057 = vrot.slane %v1056, 4
    %v1058 = vrot.slane %v147, 6
    %v1059 = vrot.slane %v143, 7
    %v1060 = vor.u32 %v1058, %v1059
    %v1061 = vsel %vm1020, %v1057, %v1060
    %v1062 = vrot.slane %v1060, 4
    %v1063 = vrot.slane %v157, 6
    %v1064 = vrot.slane %v153, 7
    %v1065 = vor.u32 %v1063, %v1064
    %v1066 = vsel %vm1020, %v1062, %v1065
    %v1067 = vrot.slane %v1065, 4
    %v1068 = vrot.slane %v167, 6
    %v1069 = vrot.slane %v163, 7
    %v1070 = vor.u32 %v1068, %v1069
    %v1071 = vsel %vm1020, %v1067, %v1070
    %v1072 = vrot.slane %v1070, 4
    %v1073 = vrot.slane %v177, 6
    %v1074 = vrot.slane %v173, 7
    %v1075 = vor.u32 %v1073, %v1074
    %v1076 = vsel %vm1020, %v1072, %v1075
    %v1077 = vrot.slane %v1075, 4
    %v1078 = vrot.slane %v187, 6
    %v1079 = vrot.slane %v183, 7
    %v1080 = vor.u32 %v1078, %v1079
    %v1081 = vsel %vm1020, %v1077, %v1080
    %v1082 = vrot.slane %v1080, 4
    %v1083 = vrot.slane %v701, 6
    %v1084 = vrot.slane %v193, 7
    %v1085 = vor.u32 %v1083, %v1084
    %v1086 = vsel %vm1020, %v1082, %v1085
    %v1087 = vunpack.c.l.b16 %v1028
    %v1088 = vunpack.c.l.b16 %v1033
    %v1089 = vunpack.c.l.b16 %v1038
    %v1090 = vunpack.c.l.b16 %v1043
    %v1091 = vunpack.c.l.b16 %v1048
    %v1092 = vunpack.c.l.b16 %v1053
    %v1093 = vunpack.c.l.b16 %v1061
    %v1094 = vunpack.c.l.b16 %v1066
    %v1095 = vunpack.c.l.b16 %v1071
    %v1096 = vunpack.c.l.b16 %v1076
    %v1097 = vunpack.c.l.b16 %v1081
    %v1098 = vunpack.c.l.b16 %v1086
    %v1099 = vpack.c.b16 %v1088, %v1087
    %v1100 = vpack.c.b16 %v1090, %v1089
    %v1101 = vpack.c.b16 %v1092, %v1091
    %v1102 = vpack.c.b16 %v1094, %v1093
    %v1103 = vpack.c.b16 %v1096, %v1095
    %v1104 = vpack.c.b16 %v1098, %v1097
    %v1107 = vunpack.c.l.b16 %v60
    %v1108 = vunpack.c.l.b16 %v61
    %v1109 = vpack.c.b16 %v1108, %v1107
    %v1112 = vsel %vm221, %v1099, 0
    %v1115 = vsel %vm221, %v1100, 0
    %v1118 = vsel %vm221, %v1101, 0
    %v1121 = vsel %vm221, %v1102, 0
    %v1124 = vsel %vm221, %v1103, 0
    %v1127 = vsel %vm221, %v1104, 0
    %1129 = vmatprep.subr.bf16.mxu0 0
    %1130 = vmatpush1.bf16.msra.mxu0 %v1109
    %1131 = vmatprep.subr.bf16.mxu0 0
    %1132 = vmatpush1.bf16.msra.mxu0 0
    %1133 = vmatprep.subr.bf16.mxu0 0
    %1134 = vmatpush1.bf16.msra.mxu0 0
    %1135 = vmatprep.subr.bf16.mxu0 0
    %1136 = vmatpush1.bf16.msra.mxu0 0
    %1137 = vmatprep.subr.bf16.mxu0 0
    %1138 = vmatpush1.bf16.msra.mxu0 0
    %1139 = vmatprep.subr.bf16.mxu0 0
    %1140 = vmatpush1.bf16.msra.mxu0 0
    %1141 = vmatprep.subr.bf16.mxu0 0
    %1142 = vmatpush1.bf16.msra.mxu0 0
    %1143 = vmatprep.subr.bf16.mxu0 0
    %1144 = vmatpush1.bf16.msra.mxu0 0
    %1145 = vmatprep.subr.bf16.mxu0 0
    %1146 = vmatpush1.bf16.msra.mxu0 0
    %1147 = vmatprep.subr.bf16.mxu0 0
    %1148 = vmatpush1.bf16.msra.mxu0 0
    %1149 = vmatprep.subr.bf16.mxu0 0
    %1150 = vmatpush1.bf16.msra.mxu0 0
    %1151 = vmatprep.subr.bf16.mxu0 0
    %1152 = vmatpush1.bf16.msra.mxu0 0
    %1153 = vmatprep.subr.bf16.mxu0 0
    %1154 = vmatpush1.bf16.msra.mxu0 0
    %1155 = vmatprep.subr.bf16.mxu0 0
    %1156 = vmatpush1.bf16.msra.mxu0 0
    %1157 = vmatprep.subr.bf16.mxu0 0
    %1158 = vmatpush1.bf16.msra.mxu0 0
    %1159 = vmatprep.subr.bf16.mxu0 0
    %1160 = vmatpush1.bf16.msra.mxu0 0
    %1161 = vmatprep.mubr.bf16.mxu0 0
    %1162 = vmatmul.mubr.bf16.gmra.mrb[0].mxu0 %v1112
    %v1163 = vpop.f32.mrb[0].mxu0
    %v1164 = vadd.f32 0.0, %v1163
    %v1165 = vpop.f32.mrb[0].mxu0
    %v1166 = vpop.f32.mrb[0].mxu0
    %v1167 = vadd.f32 0.0, %v1166
    %v1168 = vpop.f32.mrb[0].mxu0
    %1169 = vmatprep.mubr.bf16.mxu0 0
    %1170 = vmatmul.mubr.bf16.gmra.mrb[0].mxu0 %v1115
    %v1171 = vpop.f32.mrb[0].mxu0
    %v1172 = vadd.f32 0.0, %v1171
    %v1173 = vpop.f32.mrb[0].mxu0
    %v1174 = vpop.f32.mrb[0].mxu0
    %v1175 = vadd.f32 0.0, %v1174
    %v1176 = vpop.f32.mrb[0].mxu0
    %1177 = vmatprep.mubr.bf16.mxu0 0
    %1178 = vmatmul.mubr.bf16.gmra.mrb[0].mxu0 %v1118
    %v1179 = vpop.f32.mrb[0].mxu0
    %v1180 = vadd.f32 0.0, %v1179
    %v1181 = vpop.f32.mrb[0].mxu0
    %v1182 = vpop.f32.mrb[0].mxu0
    %v1183 = vadd.f32 0.0, %v1182
    %v1184 = vpop.f32.mrb[0].mxu0
    %1185 = vmatprep.mubr.bf16.mxu0 0
    %1186 = vmatmul.mubr.bf16.gmra.mrb[0].mxu0 %v1121
    %v1187 = vpop.f32.mrb[0].mxu0
    %v1188 = vadd.f32 0.0, %v1187
    %v1189 = vpop.f32.mrb[0].mxu0
    %v1190 = vpop.f32.mrb[0].mxu0
    %v1191 = vadd.f32 0.0, %v1190
    %v1192 = vpop.f32.mrb[0].mxu0
    %1193 = vmatprep.mubr.bf16.mxu0 0
    %1194 = vmatmul.mubr.bf16.gmra.mrb[0].mxu0 %v1124
    %v1195 = vpop.f32.mrb[0].mxu0
    %v1196 = vadd.f32 0.0, %v1195
    %v1197 = vpop.f32.mrb[0].mxu0
    %v1198 = vpop.f32.mrb[0].mxu0
    %v1199 = vadd.f32 0.0, %v1198
    %v1200 = vpop.f32.mrb[0].mxu0
    %1201 = vmatprep.mubr.bf16.mxu0 0
    %1202 = vmatmul.mubr.bf16.gmra.mrb[0].mxu0 %v1127
    %v1203 = vpop.f32.mrb[0].mxu0
    %v1204 = vadd.f32 0.0, %v1203
    %v1205 = vpop.f32.mrb[0].mxu0
    %v1206 = vpop.f32.mrb[0].mxu0
    %v1207 = vadd.f32 0.0, %v1206
    %v1208 = vpop.f32.mrb[0].mxu0
    %1209 = vdwg.mxu0
    %v1210 = vadd.f32 %v1006, %v1164
    %v1211 = vadd.f32 %v1007, %v1167
    %v1212 = vadd.f32 %v1008, %v1172
    %v1213 = vadd.f32 %v1009, %v1175
    %v1214 = vadd.f32 %v1010, %v1180
    %v1215 = vadd.f32 %v1011, %v1183
    %v1216 = vadd.f32 %v1012, %v1188
    %v1217 = vadd.f32 %v1013, %v1191
    %v1218 = vadd.f32 %v1014, %v1196
    %v1219 = vadd.f32 %v1015, %v1199
    %v1220 = vadd.f32 %v1016, %v1204
    %v1221 = vadd.f32 %v1017, %v1207
    %vm1222 = vcmask 1040384
    %vm1223 = vcmask 1044484
    %vm1224 = vmor %vm1222, %vm1223
    %v1225 = vrot.slane %v36, 7
    %v1226 = vrot.slane %v1225, 4
    %v1227 = vrot.slane %v37, 7
    %v1228 = vsel %vm1224, %v1226, %v1227
    %v1229 = vrot.slane %v1227, 4
    %v1230 = vrot.slane %v38, 7
    %v1231 = vsel %vm1224, %v1229, %v1230
    %v1232 = vrot.slane %v1230, 4
    %v1233 = vrot.slane %v39, 7
    %v1234 = vsel %vm1224, %v1232, %v1233
    %v1235 = vrot.slane %v1233, 4
    %v1236 = vrot.slane %v40, 7
    %v1237 = vsel %vm1224, %v1235, %v1236
    %v1238 = vrot.slane %v1236, 4
    %v1239 = vrot.slane %v41, 7
    %v1240 = vsel %vm1224, %v1238, %v1239
    %v1241 = vrot.slane %v1239, 4
    %v1242 = vrot.slane %v42, 7
    %v1243 = vsel %vm1224, %v1241, %v1242
    %v1244 = vrot.slane %v43, 7
    %v1245 = vrot.slane %v1244, 4
    %v1246 = vrot.slane %v44, 7
    %v1247 = vsel %vm1224, %v1245, %v1246
    %v1248 = vrot.slane %v1246, 4
    %v1249 = vrot.slane %v45, 7
    %v1250 = vsel %vm1224, %v1248, %v1249
    %v1251 = vrot.slane %v1249, 4
    %v1252 = vrot.slane %v46, 7
    %v1253 = vsel %vm1224, %v1251, %v1252
    %v1254 = vrot.slane %v1252, 4
    %v1255 = vrot.slane %v47, 7
    %v1256 = vsel %vm1224, %v1254, %v1255
    %v1257 = vrot.slane %v1255, 4
    %v1258 = vrot.slane %v48, 7
    %v1259 = vsel %vm1224, %v1257, %v1258
    %v1260 = vrot.slane %v1258, 4
    %v1261 = vrot.slane %v49, 7
    %v1262 = vsel %vm1224, %v1260, %v1261
    %v1263 = vunpack.c.l.b16 %v1228
    %v1264 = vunpack.c.l.b16 %v1231
    %v1265 = vunpack.c.l.b16 %v1234
    %v1266 = vunpack.c.l.b16 %v1237
    %v1267 = vunpack.c.l.b16 %v1240
    %v1268 = vunpack.c.l.b16 %v1243
    %v1269 = vunpack.c.l.b16 %v1247
    %v1270 = vunpack.c.l.b16 %v1250
    %v1271 = vunpack.c.l.b16 %v1253
    %v1272 = vunpack.c.l.b16 %v1256
    %v1273 = vunpack.c.l.b16 %v1259
    %v1274 = vunpack.c.l.b16 %v1262
    %v1275 = vpack.c.b16 %v1264, %v1263
    %v1276 = vpack.c.b16 %v1266, %v1265
    %v1277 = vpack.c.b16 %v1268, %v1267
    %v1278 = vpack.c.b16 %v1270, %v1269
    %v1279 = vpack.c.b16 %v1272, %v1271
    %v1280 = vpack.c.b16 %v1274, %v1273
    %v1283 = vunpack.c.l.b16 %v62
    %v1284 = vunpack.c.l.b16 %v63
    %v1285 = vpack.c.b16 %v1284, %v1283
    %v1288 = vsel %vm221, %v1275, 0
    %v1291 = vsel %vm221, %v1276, 0
    %v1294 = vsel %vm221, %v1277, 0
    %v1297 = vsel %vm221, %v1278, 0
    %v1300 = vsel %vm221, %v1279, 0
    %v1303 = vsel %vm221, %v1280, 0
    %1305 = vmatprep.subr.bf16.mxu0 0
    %1306 = vmatpush1.bf16.msra.mxu0 %v1285
    %1307 = vmatprep.subr.bf16.mxu0 0
    %1308 = vmatpush1.bf16.msra.mxu0 0
    %1309 = vmatprep.subr.bf16.mxu0 0
    %1310 = vmatpush1.bf16.msra.mxu0 0
    %1311 = vmatprep.subr.bf16.mxu0 0
    %1312 = vmatpush1.bf16.msra.mxu0 0
    %1313 = vmatprep.subr.bf16.mxu0 0
    %1314 = vmatpush1.bf16.msra.mxu0 0
    %1315 = vmatprep.subr.bf16.mxu0 0
    %1316 = vmatpush1.bf16.msra.mxu0 0
    %1317 = vmatprep.subr.bf16.mxu0 0
    %1318 = vmatpush1.bf16.msra.mxu0 0
    %1319 = vmatprep.subr.bf16.mxu0 0
    %1320 = vmatpush1.bf16.msra.mxu0 0
    %1321 = vmatprep.subr.bf16.mxu0 0
    %1322 = vmatpush1.bf16.msra.mxu0 0
    %1323 = vmatprep.subr.bf16.mxu0 0
    %1324 = vmatpush1.bf16.msra.mxu0 0
    %1325 = vmatprep.subr.bf16.mxu0 0
    %1326 = vmatpush1.bf16.msra.mxu0 0
    %1327 = vmatprep.subr.bf16.mxu0 0
    %1328 = vmatpush1.bf16.msra.mxu0 0
    %1329 = vmatprep.subr.bf16.mxu0 0
    %1330 = vmatpush1.bf16.msra.mxu0 0
    %1331 = vmatprep.subr.bf16.mxu0 0
    %1332 = vmatpush1.bf16.msra.mxu0 0
    %1333 = vmatprep.subr.bf16.mxu0 0
    %1334 = vmatpush1.bf16.msra.mxu0 0
    %1335 = vmatprep.subr.bf16.mxu0 0
    %1336 = vmatpush1.bf16.msra.mxu0 0
    %1337 = vmatprep.mubr.bf16.mxu0 0
    %1338 = vmatmul.mubr.bf16.gmra.mrb[0].mxu0 %v1288
    %v1339 = vpop.f32.mrb[0].mxu0
    %v1340 = vadd.f32 0.0, %v1339
    %v1341 = vpop.f32.mrb[0].mxu0
    %v1342 = vpop.f32.mrb[0].mxu0
    %v1343 = vadd.f32 0.0, %v1342
    %v1344 = vpop.f32.mrb[0].mxu0
    %1345 = vmatprep.mubr.bf16.mxu0 0
    %1346 = vmatmul.mubr.bf16.gmra.mrb[0].mxu0 %v1291
    %v1347 = vpop.f32.mrb[0].mxu0
    %v1348 = vadd.f32 0.0, %v1347
    %v1349 = vpop.f32.mrb[0].mxu0
    %v1350 = vpop.f32.mrb[0].mxu0
    %v1351 = vadd.f32 0.0, %v1350
    %v1352 = vpop.f32.mrb[0].mxu0
    %1353 = vmatprep.mubr.bf16.mxu0 0
    %1354 = vmatmul.mubr.bf16.gmra.mrb[0].mxu0 %v1294
    %v1355 = vpop.f32.mrb[0].mxu0
    %v1356 = vadd.f32 0.0, %v1355
    %v1357 = vpop.f32.mrb[0].mxu0
    %v1358 = vpop.f32.mrb[0].mxu0
    %v1359 = vadd.f32 0.0, %v1358
    %v1360 = vpop.f32.mrb[0].mxu0
    %1361 = vmatprep.mubr.bf16.mxu0 0
    %1362 = vmatmul.mubr.bf16.gmra.mrb[0].mxu0 %v1297
    %v1363 = vpop.f32.mrb[0].mxu0
    %v1364 = vadd.f32 0.0, %v1363
    %v1365 = vpop.f32.mrb[0].mxu0
    %v1366 = vpop.f32.mrb[0].mxu0
    %v1367 = vadd.f32 0.0, %v1366
    %v1368 = vpop.f32.mrb[0].mxu0
    %1369 = vmatprep.mubr.bf16.mxu0 0
    %1370 = vmatmul.mubr.bf16.gmra.mrb[0].mxu0 %v1300
    %v1371 = vpop.f32.mrb[0].mxu0
    %v1372 = vadd.f32 0.0, %v1371
    %v1373 = vpop.f32.mrb[0].mxu0
    %v1374 = vpop.f32.mrb[0].mxu0
    %v1375 = vadd.f32 0.0, %v1374
    %v1376 = vpop.f32.mrb[0].mxu0
    %1377 = vmatprep.mubr.bf16.mxu0 0
    %1378 = vmatmul.mubr.bf16.gmra.mrb[0].mxu0 %v1303
    %v1379 = vpop.f32.mrb[0].mxu0
    %v1380 = vadd.f32 0.0, %v1379
    %v1381 = vpop.f32.mrb[0].mxu0
    %v1382 = vpop.f32.mrb[0].mxu0
    %v1383 = vadd.f32 0.0, %v1382
    %v1384 = vpop.f32.mrb[0].mxu0
    %1385 = vdwg.mxu0
    %v1386 = vadd.f32 %v1210, %v1340
    %v1387 = vadd.f32 %v1211, %v1343
    %v1388 = vadd.f32 %v1212, %v1348
    %v1389 = vadd.f32 %v1213, %v1351
    %v1390 = vadd.f32 %v1214, %v1356
    %v1391 = vadd.f32 %v1215, %v1359
    %v1392 = vadd.f32 %v1216, %v1364
    %v1393 = vadd.f32 %v1217, %v1367
    %v1394 = vadd.f32 %v1218, %v1372
    %v1395 = vadd.f32 %v1219, %v1375
    %v1396 = vadd.f32 %v1220, %v1380
    %v1397 = vadd.f32 %v1221, %v1383
    %vm1398 = vsmask.f32 256
    %vm1399 = vsmask.f32 4368
    %vm1400 = vmor %vm1398, %vm1399
    %v1401 = vrot.slane %v70, 7
    %v1402 = vrot.slane %v1401, 4
    %v1403 = vrot.slane %v83, 7
    %v1404 = vor.u32 %v1403, %v79
    %v1405 = vsel %vm1400, %v1402, %v1404
    %v1406 = vrot.slane %v1403, 4
    %v1407 = vrot.slane %v93, 7
    %v1408 = vor.u32 %v1407, %v89
    %v1409 = vsel %vm1400, %v1406, %v1408
    %v1410 = vrot.slane %v1407, 4
    %v1411 = vrot.slane %v103, 7
    %v1412 = vor.u32 %v1411, %v99
    %v1413 = vsel %vm1400, %v1410, %v1412
    %v1414 = vrot.slane %v1411, 4
    %v1415 = vrot.slane %v113, 7
    %v1416 = vor.u32 %v1415, %v109
    %v1417 = vsel %vm1400, %v1414, %v1416
    %v1418 = vrot.slane %v1415, 4
    %v1419 = vrot.slane %v123, 7
    %v1420 = vor.u32 %v1419, %v119
    %v1421 = vsel %vm1400, %v1418, %v1420
    %v1422 = vrot.slane %v1419, 4
    %v1423 = vrot.slane %v666, 7
    %v1424 = vor.u32 %v1423, %v129
    %v1425 = vsel %vm1400, %v1422, %v1424
    %v1426 = vrot.slane %v134, 7
    %v1427 = vrot.slane %v1426, 4
    %v1428 = vrot.slane %v147, 7
    %v1429 = vor.u32 %v1428, %v143
    %v1430 = vsel %vm1400, %v1427, %v1429
    %v1431 = vrot.slane %v1428, 4
    %v1432 = vrot.slane %v157, 7
    %v1433 = vor.u32 %v1432, %v153
    %v1434 = vsel %vm1400, %v1431, %v1433
    %v1435 = vrot.slane %v1432, 4
    %v1436 = vrot.slane %v167, 7
    %v1437 = vor.u32 %v1436, %v163
    %v1438 = vsel %vm1400, %v1435, %v1437
    %v1439 = vrot.slane %v1436, 4
    %v1440 = vrot.slane %v177, 7
    %v1441 = vor.u32 %v1440, %v173
    %v1442 = vsel %vm1400, %v1439, %v1441
    %v1443 = vrot.slane %v1440, 4
    %v1444 = vrot.slane %v187, 7
    %v1445 = vor.u32 %v1444, %v183
    %v1446 = vsel %vm1400, %v1443, %v1445
    %v1447 = vrot.slane %v1444, 4
    %v1448 = vrot.slane %v701, 7
    %v1449 = vor.u32 %v1448, %v193
    %v1450 = vsel %vm1400, %v1447, %v1449
    %v1451 = vunpack.c.l.b16 %v1405
    %v1452 = vunpack.c.l.b16 %v1409
    %v1453 = vunpack.c.l.b16 %v1413
    %v1454 = vunpack.c.l.b16 %v1417
    %v1455 = vunpack.c.l.b16 %v1421
    %v1456 = vunpack.c.l.b16 %v1425
    %v1457 = vunpack.c.l.b16 %v1430
    %v1458 = vunpack.c.l.b16 %v1434
    %v1459 = vunpack.c.l.b16 %v1438
    %v1460 = vunpack.c.l.b16 %v1442
    %v1461 = vunpack.c.l.b16 %v1446
    %v1462 = vunpack.c.l.b16 %v1450
    %v1463 = vpack.c.b16 %v1452, %v1451
    %v1464 = vpack.c.b16 %v1454, %v1453
    %v1465 = vpack.c.b16 %v1456, %v1455
    %v1466 = vpack.c.b16 %v1458, %v1457
    %v1467 = vpack.c.b16 %v1460, %v1459
    %v1468 = vpack.c.b16 %v1462, %v1461
    %v1471 = vunpack.c.l.b16 %v64
    %v1472 = vunpack.c.l.b16 %v65
    %v1473 = vpack.c.b16 %v1472, %v1471
    %v1476 = vsel %vm221, %v1463, 0
    %v1479 = vsel %vm221, %v1464, 0
    %v1482 = vsel %vm221, %v1465, 0
    %v1485 = vsel %vm221, %v1466, 0
    %v1488 = vsel %vm221, %v1467, 0
    %v1491 = vsel %vm221, %v1468, 0
    %1493 = vmatprep.subr.bf16.mxu0 0
    %1494 = vmatpush1.bf16.msra.mxu0 %v1473
    %1495 = vmatprep.subr.bf16.mxu0 0
    %1496 = vmatpush1.bf16.msra.mxu0 0
    %1497 = vmatprep.subr.bf16.mxu0 0
    %1498 = vmatpush1.bf16.msra.mxu0 0
    %1499 = vmatprep.subr.bf16.mxu0 0
    %1500 = vmatpush1.bf16.msra.mxu0 0
    %1501 = vmatprep.subr.bf16.mxu0 0
    %1502 = vmatpush1.bf16.msra.mxu0 0
    %1503 = vmatprep.subr.bf16.mxu0 0
    %1504 = vmatpush1.bf16.msra.mxu0 0
    %1505 = vmatprep.subr.bf16.mxu0 0
    %1506 = vmatpush1.bf16.msra.mxu0 0
    %1507 = vmatprep.subr.bf16.mxu0 0
    %1508 = vmatpush1.bf16.msra.mxu0 0
    %1509 = vmatprep.subr.bf16.mxu0 0
    %1510 = vmatpush1.bf16.msra.mxu0 0
    %1511 = vmatprep.subr.bf16.mxu0 0
    %1512 = vmatpush1.bf16.msra.mxu0 0
    %1513 = vmatprep.subr.bf16.mxu0 0
    %1514 = vmatpush1.bf16.msra.mxu0 0
    %1515 = vmatprep.subr.bf16.mxu0 0
    %1516 = vmatpush1.bf16.msra.mxu0 0
    %1517 = vmatprep.subr.bf16.mxu0 0
    %1518 = vmatpush1.bf16.msra.mxu0 0
    %1519 = vmatprep.subr.bf16.mxu0 0
    %1520 = vmatpush1.bf16.msra.mxu0 0
    %1521 = vmatprep.subr.bf16.mxu0 0
    %1522 = vmatpush1.bf16.msra.mxu0 0
    %1523 = vmatprep.subr.bf16.mxu0 0
    %1524 = vmatpush1.bf16.msra.mxu0 0
    %1525 = vmatprep.mubr.bf16.mxu0 0
    %1526 = vmatmul.mubr.bf16.gmra.mrb[0].mxu0 %v1476
    %v1527 = vpop.f32.mrb[0].mxu0
    %v1528 = vadd.f32 0.0, %v1527
    %v1529 = vpop.f32.mrb[0].mxu0
    %v1530 = vpop.f32.mrb[0].mxu0
    %v1531 = vadd.f32 0.0, %v1530
    %v1532 = vpop.f32.mrb[0].mxu0
    %1533 = vmatprep.mubr.bf16.mxu0 0
    %1534 = vmatmul.mubr.bf16.gmra.mrb[0].mxu0 %v1479
    %v1535 = vpop.f32.mrb[0].mxu0
    %v1536 = vadd.f32 0.0, %v1535
    %v1537 = vpop.f32.mrb[0].mxu0
    %v1538 = vpop.f32.mrb[0].mxu0
    %v1539 = vadd.f32 0.0, %v1538
    %v1540 = vpop.f32.mrb[0].mxu0
    %1541 = vmatprep.mubr.bf16.mxu0 0
    %1542 = vmatmul.mubr.bf16.gmra.mrb[0].mxu0 %v1482
    %v1543 = vpop.f32.mrb[0].mxu0
    %v1544 = vadd.f32 0.0, %v1543
    %v1545 = vpop.f32.mrb[0].mxu0
    %v1546 = vpop.f32.mrb[0].mxu0
    %v1547 = vadd.f32 0.0, %v1546
    %v1548 = vpop.f32.mrb[0].mxu0
    %1549 = vmatprep.mubr.bf16.mxu0 0
    %1550 = vmatmul.mubr.bf16.gmra.mrb[0].mxu0 %v1485
    %v1551 = vpop.f32.mrb[0].mxu0
    %v1552 = vadd.f32 0.0, %v1551
    %v1553 = vpop.f32.mrb[0].mxu0
    %v1554 = vpop.f32.mrb[0].mxu0
    %v1555 = vadd.f32 0.0, %v1554
    %v1556 = vpop.f32.mrb[0].mxu0
    %1557 = vmatprep.mubr.bf16.mxu0 0
    %1558 = vmatmul.mubr.bf16.gmra.mrb[0].mxu0 %v1488
    %v1559 = vpop.f32.mrb[0].mxu0
    %v1560 = vadd.f32 0.0, %v1559
    %v1561 = vpop.f32.mrb[0].mxu0
    %v1562 = vpop.f32.mrb[0].mxu0
    %v1563 = vadd.f32 0.0, %v1562
    %v1564 = vpop.f32.mrb[0].mxu0
    %1565 = vmatprep.mubr.bf16.mxu0 0
    %1566 = vmatmul.mubr.bf16.gmra.mrb[0].mxu0 %v1491
    %v1567 = vpop.f32.mrb[0].mxu0
    %v1568 = vadd.f32 0.0, %v1567
    %v1569 = vpop.f32.mrb[0].mxu0
    %v1570 = vpop.f32.mrb[0].mxu0
    %v1571 = vadd.f32 0.0, %v1570
    %v1572 = vpop.f32.mrb[0].mxu0
    %1573 = vdwg.mxu0
    %v1574 = vadd.f32 %v1386, %v1528
    %v1575 = vadd.f32 %v1387, %v1531
    %v1576 = vadd.f32 %v1388, %v1536
    %v1577 = vadd.f32 %v1389, %v1539
    %v1578 = vadd.f32 %v1390, %v1544
    %v1579 = vadd.f32 %v1391, %v1547
    %v1580 = vadd.f32 %v1392, %v1552
    %v1581 = vadd.f32 %v1393, %v1555
    %v1582 = vadd.f32 %v1394, %v1560
    %v1583 = vadd.f32 %v1395, %v1563
    %v1584 = vadd.f32 %v1396, %v1568
    %v1585 = vadd.f32 %v1397, %v1571
    %v1586 = vld [vmem:[%s2] sm:$0x1]
    %v1588 = vlaneseq
    %v1589 = vshrl.u32 %v1588, 7
    %v1590 = vsub.s32 0, %v1589
    %v1591 = vrot.slane %v1586, %v1590
    %v1593 = vadd.f32 %v1574, %v1591
    %v1594 = vadd.f32 %v1575, %v1591
    %v1595 = vadd.f32 %v1576, %v1591
    %v1596 = vadd.f32 %v1577, %v1591
    %v1597 = vadd.f32 %v1578, %v1591
    %v1598 = vadd.f32 %v1579, %v1591
    %v1599 = vadd.f32 %v1580, %v1591
    %v1600 = vadd.f32 %v1581, %v1591
    %v1601 = vadd.f32 %v1582, %v1591
    %v1602 = vadd.f32 %v1583, %v1591
    %v1603 = vadd.f32 %v1584, %v1591
    %v1604 = vadd.f32 %v1585, %v1591
    %v1605 = vmax.f32 %v1593, 0.0
    %v1606 = vmax.f32 %v1594, 0.0
    %v1607 = vmax.f32 %v1595, 0.0
    %v1608 = vmax.f32 %v1596, 0.0
    %v1609 = vmax.f32 %v1597, 0.0
    %v1610 = vmax.f32 %v1598, 0.0
    %v1611 = vmax.f32 %v1599, 0.0
    %v1612 = vmax.f32 %v1600, 0.0
    %v1613 = vmax.f32 %v1601, 0.0
    %v1614 = vmax.f32 %v1602, 0.0
    %v1615 = vmax.f32 %v1603, 0.0
    %v1616 = vmax.f32 %v1604, 0.0
    %v1617 = vld [vmem:[#allocation3] sm:$0xff]
    %v1618 = vld [vmem:[#allocation3 + $0x8] sm:$0xff]
    %v1619 = vld [vmem:[#allocation3 + $0x10] sm:$0xff]
    %v1620 = vld [vmem:[#allocation3 + $0x18] sm:$0xff]
    %v1621 = vld [vmem:[#allocation3 + $0x20] sm:$0xff]
    %v1622 = vld [vmem:[#allocation3 + $0x28] sm:$0xff]
    %v1623 = vmul.f32 %v1605, %v1617
    %v1624 = vmul.f32 %v1606, %v1618
    %v1625 = vmul.f32 %v1607, %v1619
    %v1626 = vmul.f32 %v1608, %v1620
    %v1627 = vmul.f32 %v1609, %v1621
    %v1628 = vmul.f32 %v1610, %v1622
    %v1629 = vmul.f32 %v1611, %v1617
    %v1630 = vmul.f32 %v1612, %v1618
    %v1631 = vmul.f32 %v1613, %v1619
    %v1632 = vmul.f32 %v1614, %v1620
    %v1633 = vmul.f32 %v1615, %v1621
    %v1634 = vmul.f32 %v1616, %v1622
    %1635 = vadd.xlane.f32.xlu0 %v1623
    %v1636 = vpop.xlane.xlu0 %1635
    %1637 = vadd.xlane.f32.xlu0 %v1624
    %v1638 = vpop.xlane.xlu0 %1637
    %1639 = vadd.xlane.f32.xlu0 %v1625
    %v1640 = vpop.xlane.xlu0 %1639
    %1641 = vadd.xlane.f32.xlu0 %v1626
    %v1642 = vpop.xlane.xlu0 %1641
    %1643 = vadd.xlane.f32.xlu0 %v1627
    %v1644 = vpop.xlane.xlu0 %1643
    %1645 = vadd.xlane.f32.xlu0 %v1628
    %v1646 = vpop.xlane.xlu0 %1645
    %1647 = vadd.xlane.f32.xlu0 %v1629
    %v1648 = vpop.xlane.xlu0 %1647
    %1649 = vadd.xlane.f32.xlu0 %v1630
    %v1650 = vpop.xlane.xlu0 %1649
    %1651 = vadd.xlane.f32.xlu0 %v1631
    %v1652 = vpop.xlane.xlu0 %1651
    %1653 = vadd.xlane.f32.xlu0 %v1632
    %v1654 = vpop.xlane.xlu0 %1653
    %1655 = vadd.xlane.f32.xlu0 %v1633
    %v1656 = vpop.xlane.xlu0 %1655
    %1657 = vadd.xlane.f32.xlu0 %v1634
    %v1658 = vpop.xlane.xlu0 %1657
    %v1671 = vlaneseq
    %v1672 = vand.u32 %v1671, 127
    %v1673 = vlaneseq
    %v1674 = vshrl.u32 %v1673, 7
    %v1675 = vsub.s32 %v1672, %v1674
    %v1676 = vrot.slane %v1636, %v1675
    %v1677 = vadd.s32 %v1672, 4294967288
    %v1678 = vlaneseq
    %v1679 = vshrl.u32 %v1678, 7
    %v1680 = vsub.s32 %v1677, %v1679
    %v1681 = vrot.slane %v1638, %v1680
    %vm1682 = vcmask 130112
    %v1683 = vsel %vm1682, %v1681, %v1676
    %v1684 = vadd.s32 %v1672, 4294967280
    %v1685 = vlaneseq
    %v1686 = vshrl.u32 %v1685, 7
    %v1687 = vsub.s32 %v1684, %v1686
    %v1688 = vrot.slane %v1640, %v1687
    %vm1689 = vcmask 195712
    %v1690 = vsel %vm1689, %v1688, %v1683
    %v1691 = vadd.s32 %v1672, 4294967272
    %v1692 = vlaneseq
    %v1693 = vshrl.u32 %v1692, 7
    %v1694 = vsub.s32 %v1691, %v1693
    %v1695 = vrot.slane %v1642, %v1694
    %vm1696 = vcmask 261312
    %v1697 = vsel %vm1696, %v1695, %v1690
    %v1698 = vadd.s32 %v1672, 4294967264
    %v1699 = vlaneseq
    %v1700 = vshrl.u32 %v1699, 7
    %v1701 = vsub.s32 %v1698, %v1700
    %v1702 = vrot.slane %v1644, %v1701
    %vm1703 = vcmask 326912
    %v1704 = vsel %vm1703, %v1702, %v1697
    %v1705 = vadd.s32 %v1672, 4294967256
    %v1706 = vlaneseq
    %v1707 = vshrl.u32 %v1706, 7
    %v1708 = vsub.s32 %v1705, %v1707
    %v1709 = vrot.slane %v1646, %v1708
    %vm1710 = vcmask 392512
    %v1711 = vsel %vm1710, %v1709, %v1704
    %v1712 = vlaneseq
    %v1713 = vshrl.u32 %v1712, 7
    %v1714 = vsub.s32 %v1672, %v1713
    %v1715 = vrot.slane %v1648, %v1714
    %v1716 = vlaneseq
    %v1717 = vshrl.u32 %v1716, 7
    %v1718 = vsub.s32 %v1677, %v1717
    %v1719 = vrot.slane %v1650, %v1718
    %v1720 = vsel %vm1682, %v1719, %v1715
    %v1721 = vlaneseq
    %v1722 = vshrl.u32 %v1721, 7
    %v1723 = vsub.s32 %v1684, %v1722
    %v1724 = vrot.slane %v1652, %v1723
    %v1725 = vsel %vm1689, %v1724, %v1720
    %v1726 = vlaneseq
    %v1727 = vshrl.u32 %v1726, 7
    %v1728 = vsub.s32 %v1691, %v1727
    %v1729 = vrot.slane %v1654, %v1728
    %v1730 = vsel %vm1696, %v1729, %v1725
    %v1731 = vlaneseq
    %v1732 = vshrl.u32 %v1731, 7
    %v1733 = vsub.s32 %v1698, %v1732
    %v1734 = vrot.slane %v1656, %v1733
    %v1735 = vsel %vm1703, %v1734, %v1730
    %v1736 = vlaneseq
    %v1737 = vshrl.u32 %v1736, 7
    %v1738 = vsub.s32 %v1705, %v1737
    %v1739 = vrot.slane %v1658, %v1738
    %v1740 = vsel %vm1710, %v1739, %v1735
    %vm1741 = vcmask 1041409
    %v1742 = vsel %vm1741, %v1740, %v1711
    %vm1744 = vcmask 386048
    %v1745 = vsel %vm1744, %v1742, 0.0
    %1746 = vadd.xlane.f32.xlu0 %v1745
    %v1747 = vpop.xlane.xlu0 %1746
    %s1748 = sld [smem:[#allocation2]]
    %v1749 = vstv %s1748
    %v1750 = vadd.f32 %v1747, %v1749
    %1751 = vst [vmem:[%s5] sm:$0x3] %v1750
    // Predicated region
    $region26: #{cnn_forward.1} parent=1 // pred_check
      _
    $region27: #{cnn_forward.1} parent=1 // pred_check_branch
      %1753 = sbr.rel (0) target = $region29
    $region28: #{cnn_forward.1} parent=1 // pred_region
      _
    $region29: #{cnn_forward.1} parent=1 // pred_fallthru
      _
    // Predicated region
    $region30: #{cnn_forward.1} parent=1 // pred_check
      _
    $region31: #{cnn_forward.1} parent=1 // pred_check_branch
      %1755 = sbr.rel (0) target = $region33
    $region32: #{cnn_forward.1} parent=1 // pred_region
      _
    $region33: #{cnn_forward.1} parent=1 // pred_fallthru
      _
    %1756 = vsyncpa [#allocation4], 1

</llo_original>
